<compile_context>
chip_gen: v7x
topology: tpu7x:2x2x1
jax: 0.10.0
libtpu: 0.0.40
codegen_flags: <defaults>
</compile_context>

<pallas_src>
import inspect

import jax
import jax.numpy as jnp
import numpy as np
from jax import lax
from jax.experimental import pallas as pl
from jax.experimental.pallas import tpu as pltpu

EPS = 1e-5
HI = lax.Precision.HIGHEST
MXU_DTYPE = jnp.bfloat16   # MXU operand dtype (bf16-native on v6e/v7x); accumulation f32
SCAN_UNROLL = 8            # scan unroll factor == sublane tile height
OUTER_UNROLL = 2           # unroll of the fori_loop over 8-step blocks (sweep {1,2,4})
SCAN_DC_MAX = 512          # d_inner lane-chunk for the scan (sweep {128,256,512} at scale)

try:
    _FORI_HAS_UNROLL = "unroll" in inspect.signature(lax.fori_loop).parameters
except Exception:  # pragma: no cover
    _FORI_HAS_UNROLL = False


def _fori(lo, hi, body, init, unroll):
    if _FORI_HAS_UNROLL and unroll > 1:
        return lax.fori_loop(lo, hi, body, init, unroll=unroll)
    return lax.fori_loop(lo, hi, body, init)


def _silu_k(v):
    # EUP-friendly SiLU: exp + approximate reciprocal (both off the VALU critical path).
    return v * pl.reciprocal(1.0 + jnp.exp(-v), approx=True)


def _silu_ref(v):
    return v * jax.nn.sigmoid(v)


def _softplus(v):
    return jnp.maximum(v, 0.0) + jnp.log(1.0 + jnp.exp(-jnp.abs(v)))


def _scan_dinner_chunk(d_inner):
    if d_inner <= SCAN_DC_MAX:
        return d_inner
    for dc in (SCAN_DC_MAX, 384, 256, 128):
        if d_inner % dc == 0:
            return dc
    return d_inner


def _round_up(v, m):
    return ((v + m - 1) // m) * m


def _device_kind():
    try:
        return jax.devices()[0].device_kind.lower()
    except Exception:
        return ""


def _vmem_capacity_bytes():
    try:
        return int(pltpu.get_tpu_info().vmem_capacity_bytes)
    except Exception:
        return 128 * 2 ** 20


# ----------------------------- Pallas kernel ------------------------------- #

def residual_mamba_kernel(x_ref, wnorm_ref, win_ref, wconv_ref, bconv_ref,
                          wx_ref, wdt_ref, bdt_ref, a_ref, d_ref, wout_ref,
                          out_ref,
                          h_carry, xpad_s, delta_s, du_s, bT_s, cT_s, y_s):
    lc = pl.program_id(1)                         # time-chunk index (innermost, sequential)
    TL = x_ref.shape[1]
    d_conv, d_inner = wconv_ref.shape
    g_dt = wdt_ref.shape[0]                       # 128-padded dt_rank column group
    d_state = a_ref.shape[0]
    g_st = (wx_ref.shape[1] - g_dt) // 2          # 128-padded B / C column group width
    U = SCAN_UNROLL
    nb = TL // U
    DC = _scan_dinner_chunk(d_inner)

    # ---- new batch element: reset scan state and conv tail (rows 0..d_conv-2) ----
    @pl.when(lc == 0)
    def _():
        h_carry[...] = jnp.zeros_like(h_carry)
        if d_conv > 1:
            xpad_s[0:d_conv - 1, :] = jnp.zeros((d_conv - 1, d_inner), jnp.float32)

    x = x_ref[0]                                  # (TL, d_model), residual input (f32)

    # ---- RMSNorm ----
    ms = jnp.mean(x * x, axis=-1, keepdims=True)
    xn = x * lax.rsqrt(ms + EPS) * wnorm_ref[...]

    # ---- in_proj (bf16 MXU operands, f32 accumulation), split into x / z ----
    xz = jnp.dot(xn.astype(MXU_DTYPE), win_ref[...],
                 preferred_element_type=jnp.float32)           # (TL, 2*d_inner)
    xi = xz[:, :d_inner]
    z = xz[:, d_inner:]

    # ---- depthwise causal conv1d via persistent slab; tail carried across chunks ----
    xpad_s[d_conv - 1:, :] = xi                                # rows d_conv-1 .. d_conv-2+TL
    acc = jnp.zeros((TL, d_inner), jnp.float32)
    for k in range(d_conv):                                    # taps read from the Ref
        acc = acc + xpad_s[k:k + TL, :] * wconv_ref[k:k + 1, :]
    xc = _silu_k(acc + bconv_ref[...])                         # (TL, d_inner)
    if d_conv > 1:                                             # carry last taps forward
        xpad_s[0:d_conv - 1, :] = xpad_s[TL:TL + d_conv - 1, :]

    # ---- x_proj (lane-dense padded columns) -> delta_low_rank / B / C ----
    dbc = jnp.dot(xc.astype(MXU_DTYPE), wx_ref[...],
                  preferred_element_type=jnp.float32)          # (TL, g_dt + 2*g_st)
    delta = _softplus(jnp.dot(dbc[:, :g_dt].astype(MXU_DTYPE), wdt_ref[...],
                              preferred_element_type=jnp.float32) + bdt_ref[...])
    delta_s[...] = delta
    du_s[...] = delta * xc

    # one vxpose per chunk for B and C; staged per block, off the serial scan path
    bT_full = dbc[:, g_dt:g_dt + d_state].T                    # (d_state, TL)
    cT_full = dbc[:, g_dt + g_st:g_dt + g_st + d_state].T
    for t in range(nb):                                        # static unrolled
        bT_s[t] = bT_full[:, t * U:(t + 1) * U]
        cT_s[t] = cT_full[:, t * U:(t + 1) * U]

    # ---- sequential selective scan, blocked along d_inner, unrolled by U ----
    for c0 in range(0, d_inner, DC):                           # static lane chunks
        a_c = a_ref[:, pl.ds(c0, DC)]                          # (d_state, DC), hoisted

        def scan_block(blk, h, c0=c0, a_c=a_c):
            t0 = pl.multiple_of(blk * U, U)
            d_blk = delta_s[pl.ds(t0, U), pl.ds(c0, DC)]       # (U, DC)
            du_blk = du_s[pl.ds(t0, U), pl.ds(c0, DC)]         # (U, DC)
            bT_blk = bT_s[blk]                                 # (d_state, U)
            cT_blk = cT_s[blk]                                 # (d_state, U)
            # issue every EUP exp / dBx product of the block before the serial h-chain
            dA = [jnp.exp(d_blk[j:j + 1, :] * a_c) for j in range(U)]
            dBx = [du_blk[j:j + 1, :] * bT_blk[:, j:j + 1] for j in range(U)]
            rows = []
            for j in range(U):
                h = dA[j] * h + dBx[j]
                # C.h as VPU multiply + sublane reduce (no per-step MXU matmul)
                rows.append(jnp.sum(cT_blk[:, j:j + 1] * h, axis=0, keepdims=True))
            y_s[pl.ds(t0, U), pl.ds(c0, DC)] = jnp.concatenate(rows, axis=0)
            return h

        h0 = h_carry[:, pl.ds(c0, DC)]
        h_last = _fori(0, nb, scan_block, h0, unroll=min(OUTER_UNROLL, nb))
        h_carry[:, pl.ds(c0, DC)] = h_last                     # carry to next time chunk

    # ---- skip term, gating, out_proj (bf16 MXU), residual (f32) ----
    y = (y_s[...] + xc * d_ref[...]) * _silu_k(z)
    out_ref[0] = jnp.dot(y.astype(MXU_DTYPE), wout_ref[...],
                         preferred_element_type=jnp.float32) + x


# ------------------------------- wrapper ------------------------------------ #

def residual_block_forward(x, p, C, tl=None):
    B, L, d_model = x.shape
    d_inner, d_conv, d_state, dt_rank = C.d_inner, C.d_conv, C.d_state, C.dt_rank

    # time-chunk length: multiple of SCAN_UNROLL; v6e prefers 256 (256-wide MXU), else 128
    if tl is None:
        tl = 256 if "v6" in _device_kind() else 128
    tl = min(tl, _round_up(L, SCAN_UNROLL))
    tl = max(SCAN_UNROLL, (tl // SCAN_UNROLL) * SCAN_UNROLL)
    Lp = _round_up(L, tl)
    xp = jnp.pad(x, ((0, 0), (0, Lp - L), (0, 0))) if Lp != L else x
    n_chunks = Lp // tl
    nb = tl // SCAN_UNROLL

    # lane-dense column groups for x_proj output: [dt | B | C] at 128-aligned offsets
    g_dt = _round_up(dt_rank, 128)
    g_st = _round_up(d_state, 128)

    # kernel-layout parameters (pre-transposed; MXU weights cast to bf16; A pre-negated/exp'd)
    wnorm = p["norm_w"].reshape(1, d_model)
    win = p["W_in"].T.astype(MXU_DTYPE)                    # (d_model, 2*d_inner)
    wconv = p["w_conv"][:, 0, :].T                         # (d_conv, d_inner), f32 (VPU)
    bconv = p["b_conv"].reshape(1, d_inner)

    wxT = p["W_x"].T                                       # (d_inner, dt_rank + 2*d_state)
    wx = jnp.zeros((d_inner, g_dt + 2 * g_st), jnp.float32)
    wx = wx.at[:, :dt_rank].set(wxT[:, :dt_rank])
    wx = wx.at[:, g_dt:g_dt + d_state].set(wxT[:, dt_rank:dt_rank + d_state])
    wx = wx.at[:, g_dt + g_st:g_dt + g_st + d_state].set(wxT[:, dt_rank + d_state:])
    wx = wx.astype(MXU_DTYPE)

    wdt = jnp.zeros((g_dt, d_inner), jnp.float32).at[:dt_rank, :].set(p["W_dt"].T)
    wdt = wdt.astype(MXU_DTYPE)
    bdt = p["b_dt"].reshape(1, d_inner)
    a_t = (-jnp.exp(p["A_log"])).T                         # (d_state, d_inner), f32, hoisted
    dvec = p["D"].reshape(1, d_inner)
    wout = p["W_out"].T.astype(MXU_DTYPE)                  # (d_inner, d_model)

    def fullw(shape):
        # TODO(synk): pipeline_mode=pl.Buffered(1) here halves constant-weight VMEM (v7x).
        return pl.BlockSpec(shape, lambda b, lc: (0, 0))

    in_specs = [
        pl.BlockSpec((1, tl, d_model), lambda b, lc: (b, lc, 0)),
        fullw((1, d_model)),
        fullw((d_model, 2 * d_inner)),
        fullw((d_conv, d_inner)),
        fullw((1, d_inner)),
        fullw((d_inner, g_dt + 2 * g_st)),
        fullw((g_dt, d_inner)),
        fullw((1, d_inner)),
        fullw((d_state, d_inner)),
        fullw((1, d_inner)),
        fullw((d_inner, d_model)),
    ]
    out_specs = pl.BlockSpec((1, tl, d_model), lambda b, lc: (b, lc, 0))
    scratch = [
        pltpu.VMEM((d_state, d_inner), jnp.float32),           # h carried across chunks
        pltpu.VMEM((d_conv - 1 + tl, d_inner), jnp.float32),   # conv slab (tail + chunk)
        pltpu.VMEM((tl, d_inner), jnp.float32),                # delta
        pltpu.VMEM((tl, d_inner), jnp.float32),                # delta * x_conv
        pltpu.VMEM((nb, d_state, SCAN_UNROLL), jnp.float32),   # B^T per 8-step block
        pltpu.VMEM((nb, d_state, SCAN_UNROLL), jnp.float32),   # C^T per 8-step block
        pltpu.VMEM((tl, d_inner), jnp.float32),                # y (scan output)
    ]

    # explicit VMEM budget: per-chunk working set (+headroom), capped per TPU generation
    w_arrs = (wnorm, win, wconv, bconv, wx, wdt, bdt, a_t, dvec, wout)
    w_bytes = sum(int(np.prod(a.shape)) * a.dtype.itemsize for a in w_arrs)
    scratch_bytes = 4 * (d_state * d_inner + (d_conv - 1 + tl) * d_inner
                         + 3 * tl * d_inner + 2 * nb * d_state * SCAN_UNROLL)
    act_bytes = 4 * tl * (4 * d_model + 8 * d_inner + g_dt + 2 * g_st)
    cap = int(0.85 * _vmem_capacity_bytes())                   # leave headroom (v7x = 64 MiB)
    vmem_limit = int(min(cap, max(32 * 2 ** 20, 4 * (w_bytes + scratch_bytes + act_bytes))))
    vmem_limit = max(vmem_limit, 16 * 2 ** 20)

    out = pl.pallas_call(
        residual_mamba_kernel,
        out_shape=jax.ShapeDtypeStruct((B, Lp, d_model), jnp.float32),
        grid_spec=pltpu.PrefetchScalarGridSpec(
            num_scalar_prefetch=0,
            grid=(B, n_chunks),
            in_specs=in_specs,
            out_specs=out_specs,
            scratch_shapes=scratch,
        ),
        # NOTE: h/conv-tail carries rely on the chunk axis being innermost & sequential
        # ("arbitrary") and on the lc==0 reset; do not reorder grid axes.
        compiler_params=pltpu.CompilerParams(
            dimension_semantics=("parallel", "arbitrary"),
            vmem_limit_bytes=vmem_limit),
    )(xp, wnorm, win, wconv, bconv, wx, wdt, bdt, a_t, dvec, wout)

    return out[:, :L, :] if Lp != L else out


# --------------------------- parameter init --------------------------------- #

def init_params(key, C):
    dm, di, dc, ds, dr = C.d_model, C.d_inner, C.d_conv, C.d_state, C.dt_rank
    ks = jax.random.split(key, 8)
    W_in = jax.random.normal(ks[0], (2 * di, dm), jnp.float32) / jnp.sqrt(dm)
    w_conv = jax.random.normal(ks[1], (di, 1, dc), jnp.float32) * 0.2
    b_conv = jax.random.normal(ks[2], (di,), jnp.float32) * 0.05
    W_x = jax.random.normal(ks[3], (dr + 2 * ds, di), jnp.float32) / jnp.sqrt(di)
    dt_std = dr ** -0.5
    W_dt = jax.random.uniform(ks[4], (di, dr), jnp.float32, -dt_std, dt_std)
    dt = jnp.exp(jax.random.uniform(ks[5], (di,), jnp.float32)
                 * (jnp.log(0.1) - jnp.log(0.001)) + jnp.log(0.001))
    dt = jnp.maximum(dt, 1e-4)
    b_dt = dt + jnp.log(-jnp.expm1(-dt))               # softplus-inverse init
    A_log = jnp.log(jnp.tile(jnp.arange(1, ds + 1, dtype=jnp.float32), (di, 1)))
    D = jnp.ones((di,), jnp.float32)
    W_out = jax.random.normal(ks[6], (dm, di), jnp.float32) / jnp.sqrt(di)
    norm_w = jnp.ones((dm,), jnp.float32)
    return dict(W_in=W_in, w_conv=w_conv, b_conv=b_conv, W_x=W_x, W_dt=W_dt,
                b_dt=b_dt, A_log=A_log, D=D, W_out=W_out, norm_w=norm_w)


# --------------------------- pure-JAX reference ------------------------------ #

def reference_forward(x, p, C):
    res = x
    L = x.shape[1]
    xn = x * lax.rsqrt(jnp.mean(x * x, axis=-1, keepdims=True) + EPS) * p["norm_w"]
    xz = jnp.einsum("bld,ed->ble", xn, p["W_in"], precision=HI)
    xi, z = xz[..., :C.d_inner], xz[..., C.d_inner:]
    K = C.d_conv
    xpad = jnp.pad(xi, ((0, 0), (K - 1, 0), (0, 0)))
    conv = sum(xpad[:, k:k + L, :] * p["w_conv"][:, 0, k] for k in range(K)) + p["b_conv"]
    xc = _silu_ref(conv)
    dbc = jnp.einsum("bld,ed->ble", xc, p["W_x"], precision=HI)
    dr = dbc[..., :C.dt_rank]
    Bm = dbc[..., C.dt_rank:C.dt_rank + C.d_state]
    Cm = dbc[..., C.dt_rank + C.d_state:]
    delta = _softplus(jnp.einsum("blr,er->ble", dr, p["W_dt"], precision=HI) + p["b_dt"])
    A = -jnp.exp(p["A_log"])                               # (Di, N)
    deltaA = jnp.exp(delta[..., None] * A)                 # (B, L, Di, N)
    BX = delta[..., None] * Bm[:, :, None, :] * xc[..., None]
    h = jnp.zeros((x.shape[0], C.d_inner, C.d_state), jnp.float32)
    ys = []
    for t in range(L):
        h = deltaA[:, t] * h + BX[:, t]
        ys.append(jnp.einsum("bdn,bn->bd", h, Cm[:, t], precision=HI))
    y = jnp.stack(ys, axis=1) + p["D"] * xc
    y = y * _silu_ref(z)
    return jnp.einsum("bld,ed->ble", y, p["W_out"], precision=HI) + res


# --------------------------------- main -------------------------------------- #

if __name__ == "__main__":
    class Cfg:
        d_model = 32
        d_inner = 64
        d_conv = 4
        d_state = 16
        dt_rank = 4

    C = Cfg()
    B, L = 2, 16     # tl=8 -> two time chunks per batch, exercising the h / conv-tail carries

    key = jax.random.PRNGKey(0)
    params = init_params(key, C)
    x = jax.random.normal(jax.random.fold_in(key, 999), (B, L, C.d_model), jnp.float32)

    out = residual_block_forward(x, params, C, tl=8)
    out = jax.block_until_ready(out)

    ref = reference_forward(x, params, C)
    # bf16 MXU operands (f32 accumulation) + EUP approx reciprocal in SiLU, compared against
    # an f32/HIGHEST reference with a sequential scan -> allow a few % elementwise slack.
    np.testing.assert_allclose(np.asarray(out), np.asarray(ref), rtol=5e-2, atol=5e-2)

    print("KERNEL_OK")
</pallas_src>

<mosaic_0001>
module attributes {stable_mosaic.version = 11 : i64} {
  func.func @residual_mamba_kernel(%arg0: i32, %arg1: i32, %arg2: memref<1x8x32xf32, #tpu.memory_space<vmem>>, %arg3: memref<1x32xf32, #tpu.memory_space<vmem>>, %arg4: memref<32x128xbf16, #tpu.memory_space<vmem>>, %arg5: memref<4x64xf32, #tpu.memory_space<vmem>>, %arg6: memref<1x64xf32, #tpu.memory_space<vmem>>, %arg7: memref<64x384xbf16, #tpu.memory_space<vmem>>, %arg8: memref<128x64xbf16, #tpu.memory_space<vmem>>, %arg9: memref<1x64xf32, #tpu.memory_space<vmem>>, %arg10: memref<16x64xf32, #tpu.memory_space<vmem>>, %arg11: memref<1x64xf32, #tpu.memory_space<vmem>>, %arg12: memref<64x32xbf16, #tpu.memory_space<vmem>>, %arg13: memref<1x8x32xf32, #tpu.memory_space<vmem>>, %arg14: memref<16x64xf32, #tpu.memory_space<vmem>>, %arg15: memref<11x64xf32, #tpu.memory_space<vmem>>, %arg16: memref<8x64xf32, #tpu.memory_space<vmem>>, %arg17: memref<8x64xf32, #tpu.memory_space<vmem>>, %arg18: memref<1x16x8xf32, #tpu.memory_space<vmem>>, %arg19: memref<1x16x8xf32, #tpu.memory_space<vmem>>, %arg20: memref<8x64xf32, #tpu.memory_space<vmem>>) attributes {dimension_semantics = [#tpu.dimension_semantics<parallel>, #tpu.dimension_semantics<arbitrary>], iteration_bounds = array<i64: 2, 2>, scalar_prefetch = 0 : i64, scratch_operands = 7 : i64, tpu.core_type = #tpu.core_type<tc>, window_params = [{transform_indices = @transform_0, window_bounds = array<i64: 1, 8, 32>}, {pipeline_mode = #tpu.pipeline_mode<synchronous>, transform_indices = @transform_1, window_bounds = array<i64: 1, 32>}, {pipeline_mode = #tpu.pipeline_mode<synchronous>, transform_indices = @transform_2, window_bounds = array<i64: 32, 128>}, {pipeline_mode = #tpu.pipeline_mode<synchronous>, transform_indices = @transform_3, window_bounds = array<i64: 4, 64>}, {pipeline_mode = #tpu.pipeline_mode<synchronous>, transform_indices = @transform_4, window_bounds = array<i64: 1, 64>}, {pipeline_mode = #tpu.pipeline_mode<synchronous>, transform_indices = @transform_5, window_bounds = array<i64: 64, 384>}, {pipeline_mode = #tpu.pipeline_mode<synchronous>, transform_indices = @transform_6, window_bounds = array<i64: 128, 64>}, {pipeline_mode = #tpu.pipeline_mode<synchronous>, transform_indices = @transform_7, window_bounds = array<i64: 1, 64>}, {pipeline_mode = #tpu.pipeline_mode<synchronous>, transform_indices = @transform_8, window_bounds = array<i64: 16, 64>}, {pipeline_mode = #tpu.pipeline_mode<synchronous>, transform_indices = @transform_9, window_bounds = array<i64: 1, 64>}, {pipeline_mode = #tpu.pipeline_mode<synchronous>, transform_indices = @transform_10, window_bounds = array<i64: 64, 32>}, {transform_indices = @transform_11, window_bounds = array<i64: 1, 8, 32>}]} {
    %c0_i32 = arith.constant 0 : i32
    %0 = arith.cmpi eq, %arg1, %c0_i32 : i32
    %1 = arith.extui %0 : i1 to i32
    %c0_i32_0 = arith.constant 0 : i32
    %2 = arith.cmpi ne, %1, %c0_i32_0 : i32
    scf.if %2 {
      %cst_88 = arith.constant 0.000000e+00 : f32
      %256 = vector.broadcast %cst_88 : f32 to vector<16x64xf32>
      %c0_89 = arith.constant 0 : index
      %c0_90 = arith.constant 0 : index
      %257 = vector.load %arg14[%c0_89, %c0_90] : memref<16x64xf32, #tpu.memory_space<vmem>>, vector<16x64xf32>
      tpu.vector_store %arg14[%c0_89, %c0_90], %256 {strides = array<i32>} : memref<16x64xf32, #tpu.memory_space<vmem>>, vector<16x64xf32>,
      %cst_91 = arith.constant 0.000000e+00 : f32
      %258 = vector.broadcast %cst_91 : f32 to vector<3x64xf32>
      %c0_92 = arith.constant 0 : index
      %c0_93 = arith.constant 0 : index
      %259 = vector.load %arg15[%c0_92, %c0_93] : memref<11x64xf32, #tpu.memory_space<vmem>>, vector<3x64xf32>
      tpu.vector_store %arg15[%c0_92, %c0_93], %258 {strides = array<i32>} : memref<11x64xf32, #tpu.memory_space<vmem>>, vector<3x64xf32>,
    } else {
    }
    %c0 = arith.constant 0 : index
    %c0_1 = arith.constant 0 : index
    %c0_2 = arith.constant 0 : index
    %3 = vector.load %arg2[%c0, %c0_1, %c0_2] : memref<1x8x32xf32, #tpu.memory_space<vmem>>, vector<1x8x32xf32>
    %4 = vector.shape_cast %3 : vector<1x8x32xf32> to vector<8x32xf32>
    %5 = arith.mulf %4, %4 : vector<8x32xf32>
    %cst = arith.constant dense<0.000000e+00> : vector<8xf32>
    %6 = vector.multi_reduction <add>, %5, %cst [1] : vector<8x32xf32> to vector<8xf32>
    %7 = vector.shape_cast %6 : vector<8xf32> to vector<8x1xf32>
    %cst_3 = arith.constant 3.200000e+01 : f32
    %8 = vector.broadcast %cst_3 : f32 to vector<8x1xf32>
    %9 = arith.divf %7, %8 : vector<8x1xf32>
    %cst_4 = arith.constant 9.99999974E-6 : f32
    %10 = vector.broadcast %cst_4 : f32 to vector<8x1xf32>
    %11 = arith.addf %9, %10 : vector<8x1xf32>
    %12 = math.rsqrt %11 : vector<8x1xf32>
    %13 = vector.broadcast %12 : vector<8x1xf32> to vector<8x32xf32>
    %14 = arith.mulf %4, %13 : vector<8x32xf32>
    %c0_5 = arith.constant 0 : index
    %c0_6 = arith.constant 0 : index
    %15 = vector.load %arg3[%c0_5, %c0_6] : memref<1x32xf32, #tpu.memory_space<vmem>>, vector<1x32xf32>
    %16 = vector.broadcast %15 : vector<1x32xf32> to vector<8x32xf32>
    %17 = arith.mulf %14, %16 : vector<8x32xf32>
    %18 = arith.truncf %17 : vector<8x32xf32> to vector<8x32xbf16>
    %c0_7 = arith.constant 0 : index
    %c0_8 = arith.constant 0 : index
    %19 = vector.load %arg4[%c0_7, %c0_8] : memref<32x128xbf16, #tpu.memory_space<vmem>>, vector<32x128xbf16>
    %cst_9 = arith.constant dense<0.000000e+00> : vector<8x128xf32>
    %20 = tpu.matmul %18, %19, %cst_9 {dimension_numbers = #tpu.dot_dimension_numbers<[1], [0], [0], [1], [0, 0, 1, 1], [], []>} : vector<8x32xbf16>, vector<32x128xbf16>, vector<8x128xf32> -> vector<8x128xf32>
    %21 = vector.extract_strided_slice %20 {offsets = [0, 0], sizes = [8, 64], strides = [1, 1]} : vector<8x128xf32> to vector<8x64xf32>
    %22 = vector.extract_strided_slice %20 {offsets = [0, 64], sizes = [8, 64], strides = [1, 1]} : vector<8x128xf32> to vector<8x64xf32>
    %c3 = arith.constant 3 : index
    %c0_10 = arith.constant 0 : index
    %23 = vector.load %arg15[%c3, %c0_10] : memref<11x64xf32, #tpu.memory_space<vmem>>, vector<8x64xf32>
    tpu.vector_store %arg15[%c3, %c0_10], %21 {strides = array<i32>} : memref<11x64xf32, #tpu.memory_space<vmem>>, vector<8x64xf32>,
    %cst_11 = arith.constant 0.000000e+00 : f32
    %24 = vector.broadcast %cst_11 : f32 to vector<8x64xf32>
    %c0_12 = arith.constant 0 : index
    %c0_13 = arith.constant 0 : index
    %25 = vector.load %arg15[%c0_12, %c0_13] : memref<11x64xf32, #tpu.memory_space<vmem>>, vector<8x64xf32>
    %c0_14 = arith.constant 0 : index
    %c0_15 = arith.constant 0 : index
    %26 = vector.load %arg5[%c0_14, %c0_15] : memref<4x64xf32, #tpu.memory_space<vmem>>, vector<1x64xf32>
    %27 = vector.broadcast %26 : vector<1x64xf32> to vector<8x64xf32>
    %28 = arith.mulf %25, %27 : vector<8x64xf32>
    %29 = arith.addf %24, %28 : vector<8x64xf32>
    %c1 = arith.constant 1 : index
    %c0_16 = arith.constant 0 : index
    %30 = vector.load %arg15[%c1, %c0_16] : memref<11x64xf32, #tpu.memory_space<vmem>>, vector<8x64xf32>
    %c1_17 = arith.constant 1 : index
    %c0_18 = arith.constant 0 : index
    %31 = vector.load %arg5[%c1_17, %c0_18] : memref<4x64xf32, #tpu.memory_space<vmem>>, vector<1x64xf32>
    %32 = vector.broadcast %31 : vector<1x64xf32> to vector<8x64xf32>
    %33 = arith.mulf %30, %32 : vector<8x64xf32>
    %34 = arith.addf %29, %33 : vector<8x64xf32>
    %c2 = arith.constant 2 : index
    %c0_19 = arith.constant 0 : index
    %35 = vector.load %arg15[%c2, %c0_19] : memref<11x64xf32, #tpu.memory_space<vmem>>, vector<8x64xf32>
    %c2_20 = arith.constant 2 : index
    %c0_21 = arith.constant 0 : index
    %36 = vector.load %arg5[%c2_20, %c0_21] : memref<4x64xf32, #tpu.memory_space<vmem>>, vector<1x64xf32>
    %37 = vector.broadcast %36 : vector<1x64xf32> to vector<8x64xf32>
    %38 = arith.mulf %35, %37 : vector<8x64xf32>
    %39 = arith.addf %34, %38 : vector<8x64xf32>
    %c3_22 = arith.constant 3 : index
    %c0_23 = arith.constant 0 : index
    %40 = vector.load %arg15[%c3_22, %c0_23] : memref<11x64xf32, #tpu.memory_space<vmem>>, vector<8x64xf32>
    %c3_24 = arith.constant 3 : index
    %c0_25 = arith.constant 0 : index
    %41 = vector.load %arg5[%c3_24, %c0_25] : memref<4x64xf32, #tpu.memory_space<vmem>>, vector<1x64xf32>
    %42 = vector.broadcast %41 : vector<1x64xf32> to vector<8x64xf32>
    %43 = arith.mulf %40, %42 : vector<8x64xf32>
    %44 = arith.addf %39, %43 : vector<8x64xf32>
    %c0_26 = arith.constant 0 : index
    %c0_27 = arith.constant 0 : index
    %45 = vector.load %arg6[%c0_26, %c0_27] : memref<1x64xf32, #tpu.memory_space<vmem>>, vector<1x64xf32>
    %46 = vector.broadcast %45 : vector<1x64xf32> to vector<8x64xf32>
    %47 = arith.addf %44, %46 : vector<8x64xf32>
    %cst_28 = arith.constant 0.000000e+00 : f32
    %48 = vector.broadcast %cst_28 : f32 to vector<8x64xf32>
    %49 = arith.subf %48, %47 : vector<8x64xf32>
    %50 = math.exp %49 : vector<8x64xf32>
    %cst_29 = arith.constant 1.000000e+00 : f32
    %51 = vector.broadcast %cst_29 : f32 to vector<8x64xf32>
    %52 = arith.addf %51, %50 : vector<8x64xf32>
    %53 = tpu.reciprocal %52 {approx = true} : vector<8x64xf32> -> vector<8x64xf32>
    %54 = arith.mulf %47, %53 : vector<8x64xf32>
    %c8 = arith.constant 8 : index
    %c0_30 = arith.constant 0 : index
    %55 = vector.load %arg15[%c8, %c0_30] : memref<11x64xf32, #tpu.memory_space<vmem>>, vector<3x64xf32>
    %c0_31 = arith.constant 0 : index
    %c0_32 = arith.constant 0 : index
    %56 = vector.load %arg15[%c0_31, %c0_32] : memref<11x64xf32, #tpu.memory_space<vmem>>, vector<3x64xf32>
    tpu.vector_store %arg15[%c0_31, %c0_32], %55 {strides = array<i32>} : memref<11x64xf32, #tpu.memory_space<vmem>>, vector<3x64xf32>,
    %57 = arith.truncf %54 : vector<8x64xf32> to vector<8x64xbf16>
    %c0_33 = arith.constant 0 : index
    %c0_34 = arith.constant 0 : index
    %58 = vector.load %arg7[%c0_33, %c0_34] : memref<64x384xbf16, #tpu.memory_space<vmem>>, vector<64x384xbf16>
    %cst_35 = arith.constant dense<0.000000e+00> : vector<8x384xf32>
    %59 = tpu.matmul %57, %58, %cst_35 {dimension_numbers = #tpu.dot_dimension_numbers<[1], [0], [0], [1], [0, 0, 1, 1], [], []>} : vector<8x64xbf16>, vector<64x384xbf16>, vector<8x384xf32> -> vector<8x384xf32>
    %60 = vector.extract_strided_slice %59 {offsets = [0, 0], sizes = [8, 128], strides = [1, 1]} : vector<8x384xf32> to vector<8x128xf32>
    %61 = arith.truncf %60 : vector<8x128xf32> to vector<8x128xbf16>
    %c0_36 = arith.constant 0 : index
    %c0_37 = arith.constant 0 : index
    %62 = vector.load %arg8[%c0_36, %c0_37] : memref<128x64xbf16, #tpu.memory_space<vmem>>, vector<128x64xbf16>
    %cst_38 = arith.constant dense<0.000000e+00> : vector<8x64xf32>
    %63 = tpu.matmul %61, %62, %cst_38 {dimension_numbers = #tpu.dot_dimension_numbers<[1], [0], [0], [1], [0, 0, 1, 1], [], []>} : vector<8x128xbf16>, vector<128x64xbf16>, vector<8x64xf32> -> vector<8x64xf32>
    %c0_39 = arith.constant 0 : index
    %c0_40 = arith.constant 0 : index
    %64 = vector.load %arg9[%c0_39, %c0_40] : memref<1x64xf32, #tpu.memory_space<vmem>>, vector<1x64xf32>
    %65 = vector.broadcast %64 : vector<1x64xf32> to vector<8x64xf32>
    %66 = arith.addf %63, %65 : vector<8x64xf32>
    %cst_41 = arith.constant 0.000000e+00 : f32
    %67 = vector.broadcast %cst_41 : f32 to vector<8x64xf32>
    %68 = arith.maximumf %66, %67 : vector<8x64xf32>
    %69 = math.absf %66 : vector<8x64xf32>
    %cst_42 = arith.constant 0.000000e+00 : f32
    %70 = vector.broadcast %cst_42 : f32 to vector<8x64xf32>
    %71 = arith.subf %70, %69 : vector<8x64xf32>
    %72 = math.exp %71 : vector<8x64xf32>
    %cst_43 = arith.constant 1.000000e+00 : f32
    %73 = vector.broadcast %cst_43 : f32 to vector<8x64xf32>
    %74 = arith.addf %73, %72 : vector<8x64xf32>
    %75 = math.log %74 : vector<8x64xf32>
    %76 = arith.addf %68, %75 : vector<8x64xf32>
    %c0_44 = arith.constant 0 : index
    %c0_45 = arith.constant 0 : index
    %77 = vector.load %arg16[%c0_44, %c0_45] : memref<8x64xf32, #tpu.memory_space<vmem>>, vector<8x64xf32>
    tpu.vector_store %arg16[%c0_44, %c0_45], %76 {strides = array<i32>} : memref<8x64xf32, #tpu.memory_space<vmem>>, vector<8x64xf32>,
    %78 = arith.mulf %76, %54 : vector<8x64xf32>
    %c0_46 = arith.constant 0 : index
    %c0_47 = arith.constant 0 : index
    %79 = vector.load %arg17[%c0_46, %c0_47] : memref<8x64xf32, #tpu.memory_space<vmem>>, vector<8x64xf32>
    tpu.vector_store %arg17[%c0_46, %c0_47], %78 {strides = array<i32>} : memref<8x64xf32, #tpu.memory_space<vmem>>, vector<8x64xf32>,
    %80 = vector.extract_strided_slice %59 {offsets = [0, 128], sizes = [8, 16], strides = [1, 1]} : vector<8x384xf32> to vector<8x16xf32>
    %81 = tpu.transpose %80, [1, 0] : vector<8x16xf32> -> vector<16x8xf32>
    %82 = vector.extract_strided_slice %59 {offsets = [0, 256], sizes = [8, 16], strides = [1, 1]} : vector<8x384xf32> to vector<8x16xf32>
    %83 = tpu.transpose %82, [1, 0] : vector<8x16xf32> -> vector<16x8xf32>
    %c0_48 = arith.constant 0 : index
    %c0_49 = arith.constant 0 : index
    %c0_50 = arith.constant 0 : index
    %84 = vector.load %arg18[%c0_48, %c0_49, %c0_50] : memref<1x16x8xf32, #tpu.memory_space<vmem>>, vector<1x16x8xf32>
    %85 = vector.shape_cast %84 : vector<1x16x8xf32> to vector<16x8xf32>
    %86 = vector.shape_cast %81 : vector<16x8xf32> to vector<1x16x8xf32>
    tpu.vector_store %arg18[%c0_48, %c0_49, %c0_50], %86 {strides = array<i32>} : memref<1x16x8xf32, #tpu.memory_space<vmem>>, vector<1x16x8xf32>,
    %c0_51 = arith.constant 0 : index
    %c0_52 = arith.constant 0 : index
    %c0_53 = arith.constant 0 : index
    %87 = vector.load %arg19[%c0_51, %c0_52, %c0_53] : memref<1x16x8xf32, #tpu.memory_space<vmem>>, vector<1x16x8xf32>
    %88 = vector.shape_cast %87 : vector<1x16x8xf32> to vector<16x8xf32>
    %89 = vector.shape_cast %83 : vector<16x8xf32> to vector<1x16x8xf32>
    tpu.vector_store %arg19[%c0_51, %c0_52, %c0_53], %89 {strides = array<i32>} : memref<1x16x8xf32, #tpu.memory_space<vmem>>, vector<1x16x8xf32>,
    %c0_54 = arith.constant 0 : index
    %c0_55 = arith.constant 0 : index
    %90 = vector.load %arg10[%c0_54, %c0_55] : memref<16x64xf32, #tpu.memory_space<vmem>>, vector<16x64xf32>
    %c0_56 = arith.constant 0 : index
    %c0_57 = arith.constant 0 : index
    %91 = vector.load %arg14[%c0_56, %c0_57] : memref<16x64xf32, #tpu.memory_space<vmem>>, vector<16x64xf32>
    %c0_i32_58 = arith.constant 0 : i32
    %c8_i32 = arith.constant 8 : i32
    %92 = arith.muli %c0_i32_58, %c8_i32 : i32
    %93 = tpu.assume_multiple %92, 8 : i32
    %94 = arith.index_cast %93 : i32 to index
    %c0_59 = arith.constant 0 : index
    %95 = vector.load %arg16[%94, %c0_59] : memref<8x64xf32, #tpu.memory_space<vmem>>, vector<8x64xf32>
    %96 = arith.index_cast %93 : i32 to index
    %c0_60 = arith.constant 0 : index
    %97 = vector.load %arg17[%96, %c0_60] : memref<8x64xf32, #tpu.memory_space<vmem>>, vector<8x64xf32>
    %98 = arith.index_cast %c0_i32_58 : i32 to index
    %c0_61 = arith.constant 0 : index
    %c0_62 = arith.constant 0 : index
    %99 = vector.load %arg18[%98, %c0_61, %c0_62] : memref<1x16x8xf32, #tpu.memory_space<vmem>>, vector<1x16x8xf32>
    %100 = vector.shape_cast %99 : vector<1x16x8xf32> to vector<16x8xf32>
    %101 = arith.index_cast %c0_i32_58 : i32 to index
    %c0_63 = arith.constant 0 : index
    %c0_64 = arith.constant 0 : index
    %102 = vector.load %arg19[%101, %c0_63, %c0_64] : memref<1x16x8xf32, #tpu.memory_space<vmem>>, vector<1x16x8xf32>
    %103 = vector.shape_cast %102 : vector<1x16x8xf32> to vector<16x8xf32>
    %104 = vector.extract_strided_slice %95 {offsets = [0, 0], sizes = [1, 64], strides = [1, 1]} : vector<8x64xf32> to vector<1x64xf32>
    %105 = vector.broadcast %104 : vector<1x64xf32> to vector<16x64xf32>
    %106 = arith.mulf %105, %90 : vector<16x64xf32>
    %107 = math.exp %106 : vector<16x64xf32>
    %108 = vector.extract_strided_slice %95 {offsets = [1, 0], sizes = [1, 64], strides = [1, 1]} : vector<8x64xf32> to vector<1x64xf32>
    %109 = vector.broadcast %108 : vector<1x64xf32> to vector<16x64xf32>
    %110 = arith.mulf %109, %90 : vector<16x64xf32>
    %111 = math.exp %110 : vector<16x64xf32>
    %112 = vector.extract_strided_slice %95 {offsets = [2, 0], sizes = [1, 64], strides = [1, 1]} : vector<8x64xf32> to vector<1x64xf32>
    %113 = vector.broadcast %112 : vector<1x64xf32> to vector<16x64xf32>
    %114 = arith.mulf %113, %90 : vector<16x64xf32>
    %115 = math.exp %114 : vector<16x64xf32>
    %116 = vector.extract_strided_slice %95 {offsets = [3, 0], sizes = [1, 64], strides = [1, 1]} : vector<8x64xf32> to vector<1x64xf32>
    %117 = vector.broadcast %116 : vector<1x64xf32> to vector<16x64xf32>
    %118 = arith.mulf %117, %90 : vector<16x64xf32>
    %119 = math.exp %118 : vector<16x64xf32>
    %120 = vector.extract_strided_slice %95 {offsets = [4, 0], sizes = [1, 64], strides = [1, 1]} : vector<8x64xf32> to vector<1x64xf32>
    %121 = vector.broadcast %120 : vector<1x64xf32> to vector<16x64xf32>
    %122 = arith.mulf %121, %90 : vector<16x64xf32>
    %123 = math.exp %122 : vector<16x64xf32>
    %124 = vector.extract_strided_slice %95 {offsets = [5, 0], sizes = [1, 64], strides = [1, 1]} : vector<8x64xf32> to vector<1x64xf32>
    %125 = vector.broadcast %124 : vector<1x64xf32> to vector<16x64xf32>
    %126 = arith.mulf %125, %90 : vector<16x64xf32>
    %127 = math.exp %126 : vector<16x64xf32>
    %128 = vector.extract_strided_slice %95 {offsets = [6, 0], sizes = [1, 64], strides = [1, 1]} : vector<8x64xf32> to vector<1x64xf32>
    %129 = vector.broadcast %128 : vector<1x64xf32> to vector<16x64xf32>
    %130 = arith.mulf %129, %90 : vector<16x64xf32>
    %131 = math.exp %130 : vector<16x64xf32>
    %132 = vector.extract_strided_slice %95 {offsets = [7, 0], sizes = [1, 64], strides = [1, 1]} : vector<8x64xf32> to vector<1x64xf32>
    %133 = vector.broadcast %132 : vector<1x64xf32> to vector<16x64xf32>
    %134 = arith.mulf %133, %90 : vector<16x64xf32>
    %135 = math.exp %134 : vector<16x64xf32>
    %136 = vector.extract_strided_slice %97 {offsets = [0, 0], sizes = [1, 64], strides = [1, 1]} : vector<8x64xf32> to vector<1x64xf32>
    %137 = vector.extract_strided_slice %100 {offsets = [0, 0], sizes = [16, 1], strides = [1, 1]} : vector<16x8xf32> to vector<16x1xf32>
    %138 = vector.broadcast %136 : vector<1x64xf32> to vector<16x64xf32>
    %139 = vector.broadcast %137 : vector<16x1xf32> to vector<16x64xf32>
    %140 = arith.mulf %138, %139 : vector<16x64xf32>
    %141 = vector.extract_strided_slice %97 {offsets = [1, 0], sizes = [1, 64], strides = [1, 1]} : vector<8x64xf32> to vector<1x64xf32>
    %142 = vector.extract_strided_slice %100 {offsets = [0, 1], sizes = [16, 1], strides = [1, 1]} : vector<16x8xf32> to vector<16x1xf32>
    %143 = vector.broadcast %141 : vector<1x64xf32> to vector<16x64xf32>
    %144 = vector.broadcast %142 : vector<16x1xf32> to vector<16x64xf32>
    %145 = arith.mulf %143, %144 : vector<16x64xf32>
    %146 = vector.extract_strided_slice %97 {offsets = [2, 0], sizes = [1, 64], strides = [1, 1]} : vector<8x64xf32> to vector<1x64xf32>
    %147 = vector.extract_strided_slice %100 {offsets = [0, 2], sizes = [16, 1], strides = [1, 1]} : vector<16x8xf32> to vector<16x1xf32>
    %148 = vector.broadcast %146 : vector<1x64xf32> to vector<16x64xf32>
    %149 = vector.broadcast %147 : vector<16x1xf32> to vector<16x64xf32>
    %150 = arith.mulf %148, %149 : vector<16x64xf32>
    %151 = vector.extract_strided_slice %97 {offsets = [3, 0], sizes = [1, 64], strides = [1, 1]} : vector<8x64xf32> to vector<1x64xf32>
    %152 = vector.extract_strided_slice %100 {offsets = [0, 3], sizes = [16, 1], strides = [1, 1]} : vector<16x8xf32> to vector<16x1xf32>
    %153 = vector.broadcast %151 : vector<1x64xf32> to vector<16x64xf32>
    %154 = vector.broadcast %152 : vector<16x1xf32> to vector<16x64xf32>
    %155 = arith.mulf %153, %154 : vector<16x64xf32>
    %156 = vector.extract_strided_slice %97 {offsets = [4, 0], sizes = [1, 64], strides = [1, 1]} : vector<8x64xf32> to vector<1x64xf32>
    %157 = vector.extract_strided_slice %100 {offsets = [0, 4], sizes = [16, 1], strides = [1, 1]} : vector<16x8xf32> to vector<16x1xf32>
    %158 = vector.broadcast %156 : vector<1x64xf32> to vector<16x64xf32>
    %159 = vector.broadcast %157 : vector<16x1xf32> to vector<16x64xf32>
    %160 = arith.mulf %158, %159 : vector<16x64xf32>
    %161 = vector.extract_strided_slice %97 {offsets = [5, 0], sizes = [1, 64], strides = [1, 1]} : vector<8x64xf32> to vector<1x64xf32>
    %162 = vector.extract_strided_slice %100 {offsets = [0, 5], sizes = [16, 1], strides = [1, 1]} : vector<16x8xf32> to vector<16x1xf32>
    %163 = vector.broadcast %161 : vector<1x64xf32> to vector<16x64xf32>
    %164 = vector.broadcast %162 : vector<16x1xf32> to vector<16x64xf32>
    %165 = arith.mulf %163, %164 : vector<16x64xf32>
    %166 = vector.extract_strided_slice %97 {offsets = [6, 0], sizes = [1, 64], strides = [1, 1]} : vector<8x64xf32> to vector<1x64xf32>
    %167 = vector.extract_strided_slice %100 {offsets = [0, 6], sizes = [16, 1], strides = [1, 1]} : vector<16x8xf32> to vector<16x1xf32>
    %168 = vector.broadcast %166 : vector<1x64xf32> to vector<16x64xf32>
    %169 = vector.broadcast %167 : vector<16x1xf32> to vector<16x64xf32>
    %170 = arith.mulf %168, %169 : vector<16x64xf32>
    %171 = vector.extract_strided_slice %97 {offsets = [7, 0], sizes = [1, 64], strides = [1, 1]} : vector<8x64xf32> to vector<1x64xf32>
    %172 = vector.extract_strided_slice %100 {offsets = [0, 7], sizes = [16, 1], strides = [1, 1]} : vector<16x8xf32> to vector<16x1xf32>
    %173 = vector.broadcast %171 : vector<1x64xf32> to vector<16x64xf32>
    %174 = vector.broadcast %172 : vector<16x1xf32> to vector<16x64xf32>
    %175 = arith.mulf %173, %174 : vector<16x64xf32>
    %176 = arith.mulf %107, %91 : vector<16x64xf32>
    %177 = arith.addf %176, %140 : vector<16x64xf32>
    %178 = vector.extract_strided_slice %103 {offsets = [0, 0], sizes = [16, 1], strides = [1, 1]} : vector<16x8xf32> to vector<16x1xf32>
    %179 = vector.broadcast %178 : vector<16x1xf32> to vector<16x64xf32>
    %180 = arith.mulf %179, %177 : vector<16x64xf32>
    %cst_65 = arith.constant dense<0.000000e+00> : vector<64xf32>
    %181 = vector.multi_reduction <add>, %180, %cst_65 [0] : vector<16x64xf32> to vector<64xf32>
    %182 = vector.shape_cast %181 : vector<64xf32> to vector<1x64xf32>
    %183 = arith.mulf %111, %177 : vector<16x64xf32>
    %184 = arith.addf %183, %145 : vector<16x64xf32>
    %185 = vector.extract_strided_slice %103 {offsets = [0, 1], sizes = [16, 1], strides = [1, 1]} : vector<16x8xf32> to vector<16x1xf32>
    %186 = vector.broadcast %185 : vector<16x1xf32> to vector<16x64xf32>
    %187 = arith.mulf %186, %184 : vector<16x64xf32>
    %cst_66 = arith.constant dense<0.000000e+00> : vector<64xf32>
    %188 = vector.multi_reduction <add>, %187, %cst_66 [0] : vector<16x64xf32> to vector<64xf32>
    %189 = vector.shape_cast %188 : vector<64xf32> to vector<1x64xf32>
    %190 = arith.mulf %115, %184 : vector<16x64xf32>
    %191 = arith.addf %190, %150 : vector<16x64xf32>
    %192 = vector.extract_strided_slice %103 {offsets = [0, 2], sizes = [16, 1], strides = [1, 1]} : vector<16x8xf32> to vector<16x1xf32>
    %193 = vector.broadcast %192 : vector<16x1xf32> to vector<16x64xf32>
    %194 = arith.mulf %193, %191 : vector<16x64xf32>
    %cst_67 = arith.constant dense<0.000000e+00> : vector<64xf32>
    %195 = vector.multi_reduction <add>, %194, %cst_67 [0] : vector<16x64xf32> to vector<64xf32>
    %196 = vector.shape_cast %195 : vector<64xf32> to vector<1x64xf32>
    %197 = arith.mulf %119, %191 : vector<16x64xf32>
    %198 = arith.addf %197, %155 : vector<16x64xf32>
    %199 = vector.extract_strided_slice %103 {offsets = [0, 3], sizes = [16, 1], strides = [1, 1]} : vector<16x8xf32> to vector<16x1xf32>
    %200 = vector.broadcast %199 : vector<16x1xf32> to vector<16x64xf32>
    %201 = arith.mulf %200, %198 : vector<16x64xf32>
    %cst_68 = arith.constant dense<0.000000e+00> : vector<64xf32>
    %202 = vector.multi_reduction <add>, %201, %cst_68 [0] : vector<16x64xf32> to vector<64xf32>
    %203 = vector.shape_cast %202 : vector<64xf32> to vector<1x64xf32>
    %204 = arith.mulf %123, %198 : vector<16x64xf32>
    %205 = arith.addf %204, %160 : vector<16x64xf32>
    %206 = vector.extract_strided_slice %103 {offsets = [0, 4], sizes = [16, 1], strides = [1, 1]} : vector<16x8xf32> to vector<16x1xf32>
    %207 = vector.broadcast %206 : vector<16x1xf32> to vector<16x64xf32>
    %208 = arith.mulf %207, %205 : vector<16x64xf32>
    %cst_69 = arith.constant dense<0.000000e+00> : vector<64xf32>
    %209 = vector.multi_reduction <add>, %208, %cst_69 [0] : vector<16x64xf32> to vector<64xf32>
    %210 = vector.shape_cast %209 : vector<64xf32> to vector<1x64xf32>
    %211 = arith.mulf %127, %205 : vector<16x64xf32>
    %212 = arith.addf %211, %165 : vector<16x64xf32>
    %213 = vector.extract_strided_slice %103 {offsets = [0, 5], sizes = [16, 1], strides = [1, 1]} : vector<16x8xf32> to vector<16x1xf32>
    %214 = vector.broadcast %213 : vector<16x1xf32> to vector<16x64xf32>
    %215 = arith.mulf %214, %212 : vector<16x64xf32>
    %cst_70 = arith.constant dense<0.000000e+00> : vector<64xf32>
    %216 = vector.multi_reduction <add>, %215, %cst_70 [0] : vector<16x64xf32> to vector<64xf32>
    %217 = vector.shape_cast %216 : vector<64xf32> to vector<1x64xf32>
    %218 = arith.mulf %131, %212 : vector<16x64xf32>
    %219 = arith.addf %218, %170 : vector<16x64xf32>
    %220 = vector.extract_strided_slice %103 {offsets = [0, 6], sizes = [16, 1], strides = [1, 1]} : vector<16x8xf32> to vector<16x1xf32>
    %221 = vector.broadcast %220 : vector<16x1xf32> to vector<16x64xf32>
    %222 = arith.mulf %221, %219 : vector<16x64xf32>
    %cst_71 = arith.constant dense<0.000000e+00> : vector<64xf32>
    %223 = vector.multi_reduction <add>, %222, %cst_71 [0] : vector<16x64xf32> to vector<64xf32>
    %224 = vector.shape_cast %223 : vector<64xf32> to vector<1x64xf32>
    %225 = arith.mulf %135, %219 : vector<16x64xf32>
    %226 = arith.addf %225, %175 : vector<16x64xf32>
    %227 = vector.extract_strided_slice %103 {offsets = [0, 7], sizes = [16, 1], strides = [1, 1]} : vector<16x8xf32> to vector<16x1xf32>
    %228 = vector.broadcast %227 : vector<16x1xf32> to vector<16x64xf32>
    %229 = arith.mulf %228, %226 : vector<16x64xf32>
    %cst_72 = arith.constant dense<0.000000e+00> : vector<64xf32>
    %230 = vector.multi_reduction <add>, %229, %cst_72 [0] : vector<16x64xf32> to vector<64xf32>
    %231 = vector.shape_cast %230 : vector<64xf32> to vector<1x64xf32>
    %232 = tpu.concatenate %182, %189, %196, %203, %210, %217, %224, %231 in 0 : vector<1x64xf32>, vector<1x64xf32>, vector<1x64xf32>, vector<1x64xf32>, vector<1x64xf32>, vector<1x64xf32>, vector<1x64xf32>, vector<1x64xf32> -> vector<8x64xf32>
    %233 = arith.index_cast %93 : i32 to index
    %c0_73 = arith.constant 0 : index
    %234 = vector.load %arg20[%233, %c0_73] : memref<8x64xf32, #tpu.memory_space<vmem>>, vector<8x64xf32>
    tpu.vector_store %arg20[%233, %c0_73], %232 {strides = array<i32>} : memref<8x64xf32, #tpu.memory_space<vmem>>, vector<8x64xf32>,
    %c1_i32 = arith.constant 1 : i32
    %c0_74 = arith.constant 0 : index
    %c0_75 = arith.constant 0 : index
    %235 = vector.load %arg14[%c0_74, %c0_75] : memref<16x64xf32, #tpu.memory_space<vmem>>, vector<16x64xf32>
    tpu.vector_store %arg14[%c0_74, %c0_75], %226 {strides = array<i32>} : memref<16x64xf32, #tpu.memory_space<vmem>>, vector<16x64xf32>,
    %c0_76 = arith.constant 0 : index
    %c0_77 = arith.constant 0 : index
    %236 = vector.load %arg20[%c0_76, %c0_77] : memref<8x64xf32, #tpu.memory_space<vmem>>, vector<8x64xf32>
    %c0_78 = arith.constant 0 : index
    %c0_79 = arith.constant 0 : index
    %237 = vector.load %arg11[%c0_78, %c0_79] : memref<1x64xf32, #tpu.memory_space<vmem>>, vector<1x64xf32>
    %238 = vector.broadcast %237 : vector<1x64xf32> to vector<8x64xf32>
    %239 = arith.mulf %54, %238 : vector<8x64xf32>
    %240 = arith.addf %236, %239 : vector<8x64xf32>
    %cst_80 = arith.constant 0.000000e+00 : f32
    %241 = vector.broadcast %cst_80 : f32 to vector<8x64xf32>
    %242 = arith.subf %241, %22 : vector<8x64xf32>
    %243 = math.exp %242 : vector<8x64xf32>
    %cst_81 = arith.constant 1.000000e+00 : f32
    %244 = vector.broadcast %cst_81 : f32 to vector<8x64xf32>
    %245 = arith.addf %244, %243 : vector<8x64xf32>
    %246 = tpu.reciprocal %245 {approx = true} : vector<8x64xf32> -> vector<8x64xf32>
    %247 = arith.mulf %22, %246 : vector<8x64xf32>
    %248 = arith.mulf %240, %247 : vector<8x64xf32>
    %249 = arith.truncf %248 : vector<8x64xf32> to vector<8x64xbf16>
    %c0_82 = arith.constant 0 : index
    %c0_83 = arith.constant 0 : index
    %250 = vector.load %arg12[%c0_82, %c0_83] : memref<64x32xbf16, #tpu.memory_space<vmem>>, vector<64x32xbf16>
    %cst_84 = arith.constant dense<0.000000e+00> : vector<8x32xf32>
    %251 = tpu.matmul %249, %250, %cst_84 {dimension_numbers = #tpu.dot_dimension_numbers<[1], [0], [0], [1], [0, 0, 1, 1], [], []>} : vector<8x64xbf16>, vector<64x32xbf16>, vector<8x32xf32> -> vector<8x32xf32>
    %252 = arith.addf %251, %4 : vector<8x32xf32>
    %c0_85 = arith.constant 0 : index
    %c0_86 = arith.constant 0 : index
    %c0_87 = arith.constant 0 : index
    %253 = vector.load %arg13[%c0_85, %c0_86, %c0_87] : memref<1x8x32xf32, #tpu.memory_space<vmem>>, vector<1x8x32xf32>
    %254 = vector.shape_cast %253 : vector<1x8x32xf32> to vector<8x32xf32>
    %255 = vector.shape_cast %252 : vector<8x32xf32> to vector<1x8x32xf32>
    tpu.vector_store %arg13[%c0_85, %c0_86, %c0_87], %255 {strides = array<i32>} : memref<1x8x32xf32, #tpu.memory_space<vmem>>, vector<1x8x32xf32>,
    return
  }
  func.func @transform_0(%arg0: i32, %arg1: i32) -> (i32, i32, i32) {
    %c0_i32 = arith.constant 0 : i32
    %c0_i32_0 = arith.constant 0 : i32
    return %arg0, %arg1, %c0_i32 : i32, i32, i32
  }
  func.func @transform_1(%arg0: i32, %arg1: i32) -> (i32, i32) {
    %c0_i32 = arith.constant 0 : i32
    %c0_i32_0 = arith.constant 0 : i32
    %c0_i32_1 = arith.constant 0 : i32
    return %c0_i32, %c0_i32_0 : i32, i32
  }
  func.func @transform_2(%arg0: i32, %arg1: i32) -> (i32, i32) {
    %c0_i32 = arith.constant 0 : i32
    %c0_i32_0 = arith.constant 0 : i32
    %c0_i32_1 = arith.constant 0 : i32
    return %c0_i32, %c0_i32_0 : i32, i32
  }
  func.func @transform_3(%arg0: i32, %arg1: i32) -> (i32, i32) {
    %c0_i32 = arith.constant 0 : i32
    %c0_i32_0 = arith.constant 0 : i32
    %c0_i32_1 = arith.constant 0 : i32
    return %c0_i32, %c0_i32_0 : i32, i32
  }
  func.func @transform_4(%arg0: i32, %arg1: i32) -> (i32, i32) {
    %c0_i32 = arith.constant 0 : i32
    %c0_i32_0 = arith.constant 0 : i32
    %c0_i32_1 = arith.constant 0 : i32
    return %c0_i32, %c0_i32_0 : i32, i32
  }
  func.func @transform_5(%arg0: i32, %arg1: i32) -> (i32, i32) {
    %c0_i32 = arith.constant 0 : i32
    %c0_i32_0 = arith.constant 0 : i32
    %c0_i32_1 = arith.constant 0 : i32
    return %c0_i32, %c0_i32_0 : i32, i32
  }
  func.func @transform_6(%arg0: i32, %arg1: i32) -> (i32, i32) {
    %c0_i32 = arith.constant 0 : i32
    %c0_i32_0 = arith.constant 0 : i32
    %c0_i32_1 = arith.constant 0 : i32
    return %c0_i32, %c0_i32_0 : i32, i32
  }
  func.func @transform_7(%arg0: i32, %arg1: i32) -> (i32, i32) {
    %c0_i32 = arith.constant 0 : i32
    %c0_i32_0 = arith.constant 0 : i32
    %c0_i32_1 = arith.constant 0 : i32
    return %c0_i32, %c0_i32_0 : i32, i32
  }
  func.func @transform_8(%arg0: i32, %arg1: i32) -> (i32, i32) {
    %c0_i32 = arith.constant 0 : i32
    %c0_i32_0 = arith.constant 0 : i32
    %c0_i32_1 = arith.constant 0 : i32
    return %c0_i32, %c0_i32_0 : i32, i32
  }
  func.func @transform_9(%arg0: i32, %arg1: i32) -> (i32, i32) {
    %c0_i32 = arith.constant 0 : i32
    %c0_i32_0 = arith.constant 0 : i32
    %c0_i32_1 = arith.constant 0 : i32
    return %c0_i32, %c0_i32_0 : i32, i32
  }
  func.func @transform_10(%arg0: i32, %arg1: i32) -> (i32, i32) {
    %c0_i32 = arith.constant 0 : i32
    %c0_i32_0 = arith.constant 0 : i32
    %c0_i32_1 = arith.constant 0 : i32
    return %c0_i32, %c0_i32_0 : i32, i32
  }
  func.func @transform_11(%arg0: i32, %arg1: i32) -> (i32, i32, i32) {
    %c0_i32 = arith.constant 0 : i32
    %c0_i32_0 = arith.constant 0 : i32
    return %arg0, %arg1, %c0_i32 : i32, i32, i32
  }
}

</mosaic_0001>

<llo_original>
// kernel: tpu_custom_call.1
$region0: #{tpu_custom_call.1}
  #allocation0 [shape = 'u32[]', space=smem, size = 0x4, offset = 0x4, fixed_abs, tag = 'smem constant byte address 0x4 - core index']
  #allocation1 [shape = 'u32[144,128]{1,0:T(1,128)}', space=vmem, size = 0x12000, scoped, tag = 'internal scratch']
  #allocation2 [shape = 'f32[16,64]{1,0:T(8,128)}', space=vmem, size = 0x2000, scoped, tag = 'scratch operand']
  #allocation3 [shape = 'f32[11,64]{1,0:T(8,128)}', space=vmem, size = 0x2000, scoped, tag = 'scratch operand']
  #allocation4 [shape = 'f32[8,64]{1,0:T(8,128)}', space=vmem, size = 0x1000, scoped, tag = 'scratch operand']
  #allocation5 [shape = 'f32[8,64]{1,0:T(8,128)}', space=vmem, size = 0x1000, scoped, tag = 'scratch operand']
  #allocation6 [shape = 'f32[1,16,8]{2,1,0:T(8,128)}', space=vmem, size = 0x2000, scoped, tag = 'scratch operand']
  #allocation7 [shape = 'f32[1,16,8]{2,1,0:T(8,128)}', space=vmem, size = 0x2000, scoped, tag = 'scratch operand']
  #allocation8 [shape = 'f32[8,64]{1,0:T(8,128)}', space=vmem, size = 0x1000, scoped, tag = 'scratch operand']
  %s0 = inlined_call_operand.vmem [shape: f32[2,16,32], index: 0, kind: input, shape index: {}]
  %s1 = inlined_call_operand.vmem [shape: f32[1,32], index: 1, kind: input, shape index: {}]
  %s2 = inlined_call_operand.hbm [shape: bf16[32,128], index: 2, kind: input, shape index: {}]
  %s3 = inlined_call_operand.hbm [shape: f32[4,64], index: 3, kind: input, shape index: {}]
  %s4 = inlined_call_operand.vmem [shape: f32[1,64], index: 4, kind: input, shape index: {}]
  %s5 = inlined_call_operand.vmem [shape: bf16[64,384], index: 5, kind: input, shape index: {}]
  %s6 = inlined_call_operand.vmem [shape: bf16[128,64], index: 6, kind: input, shape index: {}]
  %s7 = inlined_call_operand.hbm [shape: f32[1,64], index: 7, kind: input, shape index: {}]
  %s8 = inlined_call_operand.hbm [shape: f32[16,64], index: 8, kind: input, shape index: {}]
  %s9 = inlined_call_operand.hbm [shape: f32[1,64], index: 9, kind: input, shape index: {}]
  %s10 = inlined_call_operand.vmem [shape: bf16[64,32], index: 10, kind: input, shape index: {}]
  %s11 = inlined_call_operand.hbm [shape: f32[2,16,32], index: 11, kind: output, shape index: {}]
  %s12 = sld [smem:[#allocation0]]
  $region101: #{tpu_custom_call.1} parent=0
    _
  %s14 = ssub.s32 1, %s12
  %s15 = scalar_select 0, %s14, %s12
  $region1: #{tpu_custom_call.1} parent=0
    #allocation9 [shape = 'u8[8192]{0}', space=vmem, size = 0x2000, scoped, tag = 'input window, operand 2, single buffered']
    #allocation10 [shape = 's32[2]{0}', space=sflag, size = 0x8, scoped, tag = 'scoped memory for tpu_custom_call.1']
    #allocation11 [shape = 's32[2]{0}', space=sflag, size = 0x8, scoped, tag = 'scoped memory for tpu_custom_call.1']
    #allocation12 [shape = 'u8[2048]{0}', space=vmem, size = 0x800, scoped, tag = 'input window, operand 3, single buffered']
    #allocation13 [shape = 's32[1]{0}', space=sflag, size = 0x4, scoped, tag = 'scoped memory for tpu_custom_call.1']
    #allocation14 [shape = 'u8[512]{0}', space=vmem, size = 0x400, scoped, tag = 'input window, operand 7, single buffered']
    #allocation15 [shape = 'u8[8192]{0}', space=vmem, size = 0x2000, scoped, tag = 'input window, operand 8, single buffered']
    #allocation16 [shape = 's32[1]{0}', space=sflag, size = 0x4, scoped, tag = 'scoped memory for tpu_custom_call.1']
    #allocation17 [shape = 'u8[512]{0}', space=vmem, size = 0x400, scoped, tag = 'input window, operand 9, single buffered']
    #allocation18 [shape = 'u8[8192]{0}', space=vmem, size = 0x2000, scoped, tag = 'output window, operand 0']
    %16 = vsyncpa [#allocation10], 0
    %17 = vsyncpa [#allocation13], 0
    %18 = vsyncpa [#allocation16], 0
    %19 = vsyncpa [#allocation11], 0
    %s20 = scalar_lea.sflag [#allocation11], 1
    %21 = vsyncpa %s20, 0
    loop: start=0, step=1, limit=6
    $region2: #{tpu_custom_call.1} parent=1 // loop_pre_header
      _
    $region3: #{tpu_custom_call.1} parent=1 // loop_header
      %s23 = sphi 0, %s27
      %p24 = scmp.ge.s32.totalorder %s23, 6
      %s30 = sphi 0, %s42
      %s31 = sphi 0, %s38
      %s32 = sphi 0, %s30
      %s33 = sphi 0, %s31
      %s34 = sphi 0, %s32
      %s35 = sphi 0, %s33
      %s47 = sphi 0, %s49
      %s50 = sphi 0, %s47
      %s51 = sphi 0, %s50
      %s67 = sphi 0, %s51
      %s71 = sphi 0, %s71
      %s73 = sphi 0, %s71
      %s74 = sphi 0, %s73
      %s88 = sphi 0, %s74
      %s92 = sphi 0, %s92
      %s94 = sphi 0, %s92
      %s95 = sphi 0, %s94
      %s109 = sphi 0, %s95
      %s113 = sphi 0, %s113
      %s115 = sphi 0, %s113
      %s116 = sphi 0, %s115
      %s130 = sphi 0, %s116
      %s134 = sphi 0, %s134
      %s136 = sphi 0, %s134
      %s137 = sphi 0, %s136
      %s151 = sphi 0, %s137
      %s155 = sphi 0, %s155
      %s157 = sphi 0, %s155
      %s158 = sphi 0, %s157
      %s172 = sphi 0, %s158
      %s176 = sphi 0, %s176
      %s178 = sphi 0, %s176
      %s179 = sphi 0, %s178
      %s193 = sphi 0, %s179
      %s197 = sphi 0, %s197
      %s199 = sphi 0, %s197
      %s200 = sphi 0, %s199
      %s214 = sphi 0, %s200
      %s218 = sphi 0, %s218
      %s220 = sphi 0, %s218
      %s221 = sphi 0, %s220
      %s235 = sphi 0, %s221
      %s239 = sphi 0, %s239
      %s241 = sphi 0, %s239
      %s242 = sphi 0, %s241
      %s256 = sphi 0, %s242
      %s260 = sphi 0, %s260
      %s262 = sphi 0, %s260
      %s263 = sphi 0, %s262
      %s277 = sphi 0, %s263
      %s285 = sphi 0, %s287
      %s288 = sphi 0, %s285
      %s289 = sphi 0, %s288
      %s305 = sphi 0, %s289
    $region4: #{tpu_custom_call.1} parent=1 // loop_header_branch
      %26 = sbr.rel (%p24) target = $region8
    $region5: #{tpu_custom_call.1} parent=1 // loop_body
      %s28 = ssub.s32 %s23, 1
      %s29 = ssub.s32 %s23, 2
      %s36 = sadd.s32 1, %s31
      %p37 = scmp.ge.s32.totalorder %s36, 2
      %s38 = scalar_select %p37, 0, %s36
      %s39 = sadd.s32 1, %s30
      %s40 = scalar_select %p37, %s39, %s30
      %p41 = scmp.ge.s32.totalorder %s40, 2
      %s42 = scalar_select %p41, 0, %s40
      %s43 = ssub.s32 %s30, %s42
      %s44 = ssub.s32 %s31, %s38
      %s45 = sor.u32 %s43, %s44
      %p46 = scmp.eq.s32.totalorder %s45, 0
      %s48 = sadd.s32 %s47, 1
      %s49 = scalar_select %p46, %s47, %s48
      %p52 = pneg %p46
      %p53 = scmp.eq.s32.totalorder %s23, 3
      %p54 = por %p52, %p53
      %p55 = scmp.ne.s32.totalorder %s47, %s50
      %p56 = scmp.eq.s32.totalorder %s23, 0
      %p57 = por %p55, %p56
      %p58 = scmp.ne.s32.totalorder %s47, %s50
      %p59 = scmp.eq.s32.totalorder %s28, 3
      %p60 = por %p58, %p59
      %p61 = scmp.ne.s32.totalorder %s50, %s51
      %p62 = scmp.eq.s32.totalorder %s28, 0
      %p63 = por %p61, %p62
      %p64 = scmp.ne.s32.totalorder %s50, %s51
      %p65 = scmp.eq.s32.totalorder %s29, 3
      %p66 = por %p64, %p65
      %p68 = scmp.ne.s32.totalorder %s51, %s67
      %p69 = scmp.eq.s32.totalorder %s29, 0
      %p70 = por %p68, %p69
      %s72 = sadd.s32 %s71, 1
      %p75 = scmp.eq.s32.totalorder %s23, 3
      %p76 = scmp.ne.s32.totalorder %s71, %s73
      %p77 = scmp.eq.s32.totalorder %s23, 0
      %p78 = por %p76, %p77
      %p79 = scmp.ne.s32.totalorder %s71, %s73
      %p80 = scmp.eq.s32.totalorder %s28, 3
      %p81 = por %p79, %p80
      %p82 = scmp.ne.s32.totalorder %s73, %s74
      %p83 = scmp.eq.s32.totalorder %s28, 0
      %p84 = por %p82, %p83
      %p85 = scmp.ne.s32.totalorder %s73, %s74
      %p86 = scmp.eq.s32.totalorder %s29, 3
      %p87 = por %p85, %p86
      %p89 = scmp.ne.s32.totalorder %s74, %s88
      %p90 = scmp.eq.s32.totalorder %s29, 0
      %p91 = por %p89, %p90
      %s93 = sadd.s32 %s92, 1
      %p96 = scmp.eq.s32.totalorder %s23, 3
      %p97 = scmp.ne.s32.totalorder %s92, %s94
      %p98 = scmp.eq.s32.totalorder %s23, 0
      %p99 = por %p97, %p98
      %p100 = scmp.ne.s32.totalorder %s92, %s94
      %p101 = scmp.eq.s32.totalorder %s28, 3
      %p102 = por %p100, %p101
      %p103 = scmp.ne.s32.totalorder %s94, %s95
      %p104 = scmp.eq.s32.totalorder %s28, 0
      %p105 = por %p103, %p104
      %p106 = scmp.ne.s32.totalorder %s94, %s95
      %p107 = scmp.eq.s32.totalorder %s29, 3
      %p108 = por %p106, %p107
      %p110 = scmp.ne.s32.totalorder %s95, %s109
      %p111 = scmp.eq.s32.totalorder %s29, 0
      %p112 = por %p110, %p111
      %s114 = sadd.s32 %s113, 1
      %p117 = scmp.eq.s32.totalorder %s23, 3
      %p118 = scmp.ne.s32.totalorder %s113, %s115
      %p119 = scmp.eq.s32.totalorder %s23, 0
      %p120 = por %p118, %p119
      %p121 = scmp.ne.s32.totalorder %s113, %s115
      %p122 = scmp.eq.s32.totalorder %s28, 3
      %p123 = por %p121, %p122
      %p124 = scmp.ne.s32.totalorder %s115, %s116
      %p125 = scmp.eq.s32.totalorder %s28, 0
      %p126 = por %p124, %p125
      %p127 = scmp.ne.s32.totalorder %s115, %s116
      %p128 = scmp.eq.s32.totalorder %s29, 3
      %p129 = por %p127, %p128
      %p131 = scmp.ne.s32.totalorder %s116, %s130
      %p132 = scmp.eq.s32.totalorder %s29, 0
      %p133 = por %p131, %p132
      %s135 = sadd.s32 %s134, 1
      %p138 = scmp.eq.s32.totalorder %s23, 3
      %p139 = scmp.ne.s32.totalorder %s134, %s136
      %p140 = scmp.eq.s32.totalorder %s23, 0
      %p141 = por %p139, %p140
      %p142 = scmp.ne.s32.totalorder %s134, %s136
      %p143 = scmp.eq.s32.totalorder %s28, 3
      %p144 = por %p142, %p143
      %p145 = scmp.ne.s32.totalorder %s136, %s137
      %p146 = scmp.eq.s32.totalorder %s28, 0
      %p147 = por %p145, %p146
      %p148 = scmp.ne.s32.totalorder %s136, %s137
      %p149 = scmp.eq.s32.totalorder %s29, 3
      %p150 = por %p148, %p149
      %p152 = scmp.ne.s32.totalorder %s137, %s151
      %p153 = scmp.eq.s32.totalorder %s29, 0
      %p154 = por %p152, %p153
      %s156 = sadd.s32 %s155, 1
      %p159 = scmp.eq.s32.totalorder %s23, 3
      %p160 = scmp.ne.s32.totalorder %s155, %s157
      %p161 = scmp.eq.s32.totalorder %s23, 0
      %p162 = por %p160, %p161
      %p163 = scmp.ne.s32.totalorder %s155, %s157
      %p164 = scmp.eq.s32.totalorder %s28, 3
      %p165 = por %p163, %p164
      %p166 = scmp.ne.s32.totalorder %s157, %s158
      %p167 = scmp.eq.s32.totalorder %s28, 0
      %p168 = por %p166, %p167
      %p169 = scmp.ne.s32.totalorder %s157, %s158
      %p170 = scmp.eq.s32.totalorder %s29, 3
      %p171 = por %p169, %p170
      %p173 = scmp.ne.s32.totalorder %s158, %s172
      %p174 = scmp.eq.s32.totalorder %s29, 0
      %p175 = por %p173, %p174
      %s177 = sadd.s32 %s176, 1
      %p180 = scmp.eq.s32.totalorder %s23, 3
      %p181 = scmp.ne.s32.totalorder %s176, %s178
      %p182 = scmp.eq.s32.totalorder %s23, 0
      %p183 = por %p181, %p182
      %p184 = scmp.ne.s32.totalorder %s176, %s178
      %p185 = scmp.eq.s32.totalorder %s28, 3
      %p186 = por %p184, %p185
      %p187 = scmp.ne.s32.totalorder %s178, %s179
      %p188 = scmp.eq.s32.totalorder %s28, 0
      %p189 = por %p187, %p188
      %p190 = scmp.ne.s32.totalorder %s178, %s179
      %p191 = scmp.eq.s32.totalorder %s29, 3
      %p192 = por %p190, %p191
      %p194 = scmp.ne.s32.totalorder %s179, %s193
      %p195 = scmp.eq.s32.totalorder %s29, 0
      %p196 = por %p194, %p195
      %s198 = sadd.s32 %s197, 1
      %p201 = scmp.eq.s32.totalorder %s23, 3
      %p202 = scmp.ne.s32.totalorder %s197, %s199
      %p203 = scmp.eq.s32.totalorder %s23, 0
      %p204 = por %p202, %p203
      %p205 = scmp.ne.s32.totalorder %s197, %s199
      %p206 = scmp.eq.s32.totalorder %s28, 3
      %p207 = por %p205, %p206
      %p208 = scmp.ne.s32.totalorder %s199, %s200
      %p209 = scmp.eq.s32.totalorder %s28, 0
      %p210 = por %p208, %p209
      %p211 = scmp.ne.s32.totalorder %s199, %s200
      %p212 = scmp.eq.s32.totalorder %s29, 3
      %p213 = por %p211, %p212
      %p215 = scmp.ne.s32.totalorder %s200, %s214
      %p216 = scmp.eq.s32.totalorder %s29, 0
      %p217 = por %p215, %p216
      %s219 = sadd.s32 %s218, 1
      %p222 = scmp.eq.s32.totalorder %s23, 3
      %p223 = scmp.ne.s32.totalorder %s218, %s220
      %p224 = scmp.eq.s32.totalorder %s23, 0
      %p225 = por %p223, %p224
      %p226 = scmp.ne.s32.totalorder %s218, %s220
      %p227 = scmp.eq.s32.totalorder %s28, 3
      %p228 = por %p226, %p227
      %p229 = scmp.ne.s32.totalorder %s220, %s221
      %p230 = scmp.eq.s32.totalorder %s28, 0
      %p231 = por %p229, %p230
      %p232 = scmp.ne.s32.totalorder %s220, %s221
      %p233 = scmp.eq.s32.totalorder %s29, 3
      %p234 = por %p232, %p233
      %p236 = scmp.ne.s32.totalorder %s221, %s235
      %p237 = scmp.eq.s32.totalorder %s29, 0
      %p238 = por %p236, %p237
      %s240 = sadd.s32 %s239, 1
      %p243 = scmp.eq.s32.totalorder %s23, 3
      %p244 = scmp.ne.s32.totalorder %s239, %s241
      %p245 = scmp.eq.s32.totalorder %s23, 0
      %p246 = por %p244, %p245
      %p247 = scmp.ne.s32.totalorder %s239, %s241
      %p248 = scmp.eq.s32.totalorder %s28, 3
      %p249 = por %p247, %p248
      %p250 = scmp.ne.s32.totalorder %s241, %s242
      %p251 = scmp.eq.s32.totalorder %s28, 0
      %p252 = por %p250, %p251
      %p253 = scmp.ne.s32.totalorder %s241, %s242
      %p254 = scmp.eq.s32.totalorder %s29, 3
      %p255 = por %p253, %p254
      %p257 = scmp.ne.s32.totalorder %s242, %s256
      %p258 = scmp.eq.s32.totalorder %s29, 0
      %p259 = por %p257, %p258
      %s261 = sadd.s32 %s260, 1
      %p264 = scmp.eq.s32.totalorder %s23, 3
      %p265 = scmp.ne.s32.totalorder %s260, %s262
      %p266 = scmp.eq.s32.totalorder %s23, 0
      %p267 = por %p265, %p266
      %p268 = scmp.ne.s32.totalorder %s260, %s262
      %p269 = scmp.eq.s32.totalorder %s28, 3
      %p270 = por %p268, %p269
      %p271 = scmp.ne.s32.totalorder %s262, %s263
      %p272 = scmp.eq.s32.totalorder %s28, 0
      %p273 = por %p271, %p272
      %p274 = scmp.ne.s32.totalorder %s262, %s263
      %p275 = scmp.eq.s32.totalorder %s29, 3
      %p276 = por %p274, %p275
      %p278 = scmp.ne.s32.totalorder %s263, %s277
      %p279 = scmp.eq.s32.totalorder %s29, 0
      %p280 = por %p278, %p279
      %s281 = ssub.s32 %s30, %s42
      %s282 = ssub.s32 %s31, %s38
      %s283 = sor.u32 %s281, %s282
      %p284 = scmp.eq.s32.totalorder %s283, 0
      %s286 = sadd.s32 %s285, 1
      %s287 = scalar_select %p284, %s285, %s286
      %p290 = pneg %p284
      %p291 = scmp.eq.s32.totalorder %s23, 3
      %p292 = por %p290, %p291
      %p293 = scmp.ne.s32.totalorder %s285, %s288
      %p294 = scmp.eq.s32.totalorder %s23, 0
      %p295 = por %p293, %p294
      %p296 = scmp.ne.s32.totalorder %s285, %s288
      %p297 = scmp.eq.s32.totalorder %s28, 3
      %p298 = por %p296, %p297
      %p299 = scmp.ne.s32.totalorder %s288, %s289
      %p300 = scmp.eq.s32.totalorder %s28, 0
      %p301 = por %p299, %p300
      %p302 = scmp.ne.s32.totalorder %s288, %s289
      %p303 = scmp.eq.s32.totalorder %s29, 3
      %p304 = por %p302, %p303
      %p306 = scmp.ne.s32.totalorder %s289, %s305
      %p307 = scmp.eq.s32.totalorder %s29, 0
      %p308 = por %p306, %p307
      %p309 = scmp.le.s32.totalorder 1, %s23
      %p310 = scmp.lt.s32.totalorder %s23, 5
      %p311 = pnand %p309, %p310
      %p312 = pneg %p311
      // Predicated region
      $region9: #{tpu_custom_call.1} parent=5 // pred_check
        _
      $region10: #{tpu_custom_call.1} parent=5 // pred_check_branch
        %314 = sbr.rel (%p311) target = $region12
      $region11: #{tpu_custom_call.1} parent=5 // pred_region
        %s315 = ssub.s32 %s23, 1
        // Predicated region
        $region13: #{tpu_custom_call.1} parent=11 // pred_check
          %p316 = pneg %p84
        $region14: #{tpu_custom_call.1} parent=11 // pred_check_branch
          %318 = sbr.rel (%p316) target = $region16
        $region15: #{tpu_custom_call.1} parent=11 // pred_region
          _
        $region16: #{tpu_custom_call.1} parent=11 // pred_fallthru
          _
        // Predicated region
        $region17: #{tpu_custom_call.1} parent=11 // pred_check
          %p319 = pneg %p105
        $region18: #{tpu_custom_call.1} parent=11 // pred_check_branch
          %321 = sbr.rel (%p319) target = $region20
        $region19: #{tpu_custom_call.1} parent=11 // pred_region
          %s323 = ssub.s32 256, 256
          %324 = vsyncadd [#allocation10], %s323
          %s325 = sshll.u32 [#allocation9], 4
          %s326 = int_to_ptr.vmem [resolvable:$true] %s325
          %331 = dma.hbm_to_vmem [thread:$0]  %s2, 256, %s326, [#allocation10], 64, 64, 4
        $region20: #{tpu_custom_call.1} parent=11 // pred_fallthru
          _
        // Predicated region
        $region21: #{tpu_custom_call.1} parent=11 // pred_check
          %p332 = pneg %p126
        $region22: #{tpu_custom_call.1} parent=11 // pred_check_branch
          %334 = sbr.rel (%p332) target = $region24
        $region23: #{tpu_custom_call.1} parent=11 // pred_region
          %s336 = ssub.s32 64, 64
          %337 = vsyncadd [#allocation13], %s336
          %s339 = sshll.u32 [#allocation12], 4
          %s340 = int_to_ptr.vmem [resolvable:$true] %s339
          %342 = dma.hbm_to_vmem [thread:$0]  %s3, 64, %s340, [#allocation13]
        $region24: #{tpu_custom_call.1} parent=11 // pred_fallthru
          _
        // Predicated region
        $region25: #{tpu_custom_call.1} parent=11 // pred_check
          %p343 = pneg %p147
        $region26: #{tpu_custom_call.1} parent=11 // pred_check_branch
          %345 = sbr.rel (%p343) target = $region28
        $region27: #{tpu_custom_call.1} parent=11 // pred_region
          _
        $region28: #{tpu_custom_call.1} parent=11 // pred_fallthru
          _
        // Predicated region
        $region29: #{tpu_custom_call.1} parent=11 // pred_check
          %p346 = pneg %p168
        $region30: #{tpu_custom_call.1} parent=11 // pred_check_branch
          %348 = sbr.rel (%p346) target = $region32
        $region31: #{tpu_custom_call.1} parent=11 // pred_region
          _
        $region32: #{tpu_custom_call.1} parent=11 // pred_fallthru
          _
        // Predicated region
        $region33: #{tpu_custom_call.1} parent=11 // pred_check
          %p349 = pneg %p189
        $region34: #{tpu_custom_call.1} parent=11 // pred_check_branch
          %351 = sbr.rel (%p349) target = $region36
        $region35: #{tpu_custom_call.1} parent=11 // pred_region
          _
        $region36: #{tpu_custom_call.1} parent=11 // pred_fallthru
          _
        // Predicated region
        $region37: #{tpu_custom_call.1} parent=11 // pred_check
          %p352 = pneg %p210
        $region38: #{tpu_custom_call.1} parent=11 // pred_check_branch
          %354 = sbr.rel (%p352) target = $region40
        $region39: #{tpu_custom_call.1} parent=11 // pred_region
          %s356 = ssub.s32 16, 16
          %357 = vsyncadd [#allocation13], %s356
          %s359 = sshll.u32 [#allocation14], 4
          %s360 = int_to_ptr.vmem [resolvable:$true] %s359
          %362 = dma.hbm_to_vmem [thread:$0]  %s7, 16, %s360, [#allocation13]
        $region40: #{tpu_custom_call.1} parent=11 // pred_fallthru
          _
        // Predicated region
        $region41: #{tpu_custom_call.1} parent=11 // pred_check
          %p363 = pneg %p231
        $region42: #{tpu_custom_call.1} parent=11 // pred_check_branch
          %365 = sbr.rel (%p363) target = $region44
        $region43: #{tpu_custom_call.1} parent=11 // pred_region
          %s367 = ssub.s32 256, 256
          %368 = vsyncadd [#allocation16], %s367
          %s369 = sshll.u32 [#allocation15], 4
          %s370 = int_to_ptr.vmem [resolvable:$true] %s369
          %375 = dma.hbm_to_vmem [thread:$0]  %s8, 256, %s370, [#allocation16], 128, 128, 8
        $region44: #{tpu_custom_call.1} parent=11 // pred_fallthru
          _
        // Predicated region
        $region45: #{tpu_custom_call.1} parent=11 // pred_check
          %p376 = pneg %p252
        $region46: #{tpu_custom_call.1} parent=11 // pred_check_branch
          %378 = sbr.rel (%p376) target = $region48
        $region47: #{tpu_custom_call.1} parent=11 // pred_region
          %s380 = ssub.s32 16, 16
          %381 = vsyncadd [#allocation16], %s380
          %s383 = sshll.u32 [#allocation17], 4
          %s384 = int_to_ptr.vmem [resolvable:$true] %s383
          %386 = dma.hbm_to_vmem [thread:$0]  %s9, 16, %s384, [#allocation16]
        $region48: #{tpu_custom_call.1} parent=11 // pred_fallthru
          _
        // Predicated region
        $region49: #{tpu_custom_call.1} parent=11 // pred_check
          %p387 = pneg %p273
        $region50: #{tpu_custom_call.1} parent=11 // pred_check_branch
          %389 = sbr.rel (%p387) target = $region52
        $region51: #{tpu_custom_call.1} parent=11 // pred_region
          _
        $region52: #{tpu_custom_call.1} parent=11 // pred_fallthru
          _
      $region12: #{tpu_custom_call.1} parent=5 // pred_fallthru
        _
      %p390 = scmp.lt.s32.totalorder %s23, 4
      // Predicated region
      $region53: #{tpu_custom_call.1} parent=5 // pred_check
        %p391 = pneg %p390
      $region54: #{tpu_custom_call.1} parent=5 // pred_check_branch
        %393 = sbr.rel (%p391) target = $region56
      $region55: #{tpu_custom_call.1} parent=5 // pred_region
        // Predicated region
        $region57: #{tpu_custom_call.1} parent=55 // pred_check
          %p394 = pneg %p57
        $region58: #{tpu_custom_call.1} parent=55 // pred_check_branch
          %396 = sbr.rel (%p394) target = $region60
        $region59: #{tpu_custom_call.1} parent=55 // pred_region
          %p397 = scmp.lt.s32.totalorder %s30, 1
          %s398 = scalar_select %p397, %s30, 1
          %p399 = scmp.lt.s32.totalorder %s31, 1
          %s400 = scalar_select %p399, %s31, 1
          %s401 = smul.addr %s398, 2
          %s402 = sadd.s32 %s400, %s401
          %s403 = smul.addr %s402, 8
          %s404 = scalar_lea.vmem %s0, %s403
        $region60: #{tpu_custom_call.1} parent=55 // pred_fallthru
          _
      $region56: #{tpu_custom_call.1} parent=5 // pred_fallthru
        _
      %p405 = scmp.le.s32.totalorder 1, %s23
      %p406 = scmp.lt.s32.totalorder %s23, 5
      %p407 = pnand %p405, %p406
      %p408 = pneg %p407
      // Predicated region
      $region61: #{tpu_custom_call.1} parent=5 // pred_check
        _
      $region62: #{tpu_custom_call.1} parent=5 // pred_check_branch
        %410 = sbr.rel (%p407) target = $region64
      $region63: #{tpu_custom_call.1} parent=5 // pred_region
        %s411 = ssub.s32 %s23, 1
        // Predicated region
        $region65: #{tpu_custom_call.1} parent=63 // pred_check
          %p412 = pneg %p105
        $region66: #{tpu_custom_call.1} parent=63 // pred_check_branch
          %414 = sbr.rel (%p412) target = $region68
        $region67: #{tpu_custom_call.1} parent=63 // pred_region
          %415 = dma.done [#allocation10], 256
        $region68: #{tpu_custom_call.1} parent=63 // pred_fallthru
          _
        // Predicated region
        $region69: #{tpu_custom_call.1} parent=63 // pred_check
          %p416 = pneg %p126
        $region70: #{tpu_custom_call.1} parent=63 // pred_check_branch
          %418 = sbr.rel (%p416) target = $region72
        $region71: #{tpu_custom_call.1} parent=63 // pred_region
          %419 = dma.done [#allocation13], 64
        $region72: #{tpu_custom_call.1} parent=63 // pred_fallthru
          _
        // Predicated region
        $region73: #{tpu_custom_call.1} parent=63 // pred_check
          %p420 = pneg %p210
        $region74: #{tpu_custom_call.1} parent=63 // pred_check_branch
          %422 = sbr.rel (%p420) target = $region76
        $region75: #{tpu_custom_call.1} parent=63 // pred_region
          %423 = dma.done [#allocation13], 16
        $region76: #{tpu_custom_call.1} parent=63 // pred_fallthru
          _
        // Predicated region
        $region77: #{tpu_custom_call.1} parent=63 // pred_check
          %p424 = pneg %p231
        $region78: #{tpu_custom_call.1} parent=63 // pred_check_branch
          %426 = sbr.rel (%p424) target = $region80
        $region79: #{tpu_custom_call.1} parent=63 // pred_region
          %427 = dma.done [#allocation16], 256
        $region80: #{tpu_custom_call.1} parent=63 // pred_fallthru
          _
        // Predicated region
        $region81: #{tpu_custom_call.1} parent=63 // pred_check
          %p428 = pneg %p252
        $region82: #{tpu_custom_call.1} parent=63 // pred_check_branch
          %430 = sbr.rel (%p428) target = $region84
        $region83: #{tpu_custom_call.1} parent=63 // pred_region
          %431 = dma.done [#allocation16], 16
        $region84: #{tpu_custom_call.1} parent=63 // pred_fallthru
          _
        %p432 = scmp.lt.s32.totalorder %s32, 1
        %s433 = scalar_select %p432, %s32, 1
        %p434 = scmp.lt.s32.totalorder %s33, 1
        %s435 = scalar_select %p434, %s33, 1
        %s436 = smul.addr %s433, 2
        %s437 = sadd.s32 %s435, %s436
        %s438 = smul.addr %s437, 8
        %s439 = scalar_lea.vmem %s0, %s438
        %p440 = pneg %p63
        %p441 = pneg %p60
        %p442 = pneg %p84
        %p443 = pneg %p81
        %p444 = pneg %p105
        %p445 = pneg %p102
        %p446 = pneg %p126
        %p447 = pneg %p123
        %p448 = pneg %p147
        %p449 = pneg %p144
        %p450 = pneg %p168
        %p451 = pneg %p165
        %p452 = pneg %p189
        %p453 = pneg %p186
        %p454 = pneg %p210
        %p455 = pneg %p207
        %p456 = pneg %p231
        %p457 = pneg %p228
        %p458 = pneg %p252
        %p459 = pneg %p249
        %p460 = pneg %p273
        %p461 = pneg %p270
        %p462 = pneg %p301
        %p463 = pneg %p298
        %s464 = sand.u32 %s288, 1
        %s465 = scalar_lea.sflag [#allocation11], %s464
        %s466 = sand.u32 %s288, 1
        %s467 = smul.addr %s466, 8
        %s468 = scalar_lea.vmem [#allocation18], %s467
        %p469 = scmp.lt.s32.totalorder %s32, 1
        %s470 = scalar_select %p469, %s32, 1
        %p471 = scmp.lt.s32.totalorder %s33, 1
        %s472 = scalar_select %p471, %s33, 1
        %s473 = smul.addr %s470, 2
        %s474 = sadd.s32 %s472, %s473
        %s475 = smul.addr %s474, 8
        %s476 = scalar_lea.vmem %s0, %s475
        %p478 = scmp.eq.s32.totalorder %s33, 0
        // Predicated region
        $region85: #{tpu_custom_call.1} parent=63 // pred_check
          %p479 = pneg %p478
        $region86: #{tpu_custom_call.1} parent=63 // pred_check_branch
          %481 = sbr.rel (%p479) target = $region88
        $region87: #{tpu_custom_call.1} parent=63 // pred_region
          %vm482 = vcmask 523264
          %483 = vst.msk [vmem:[#allocation2] sm:$0xff] %vm482, 0.0
          %484 = vst.msk [vmem:[#allocation2 + $0x8] sm:$0xff] %vm482, 0.0
          %vm485 = vcmask 518144
          %486 = vst.msk [vmem:[#allocation3] sm:$0x7] %vm485, 0.0
        $region88: #{tpu_custom_call.1} parent=63 // pred_fallthru
          _
        %v487 = vld [vmem:[%s476] sm:$0xff]
        %v488 = vmul.f32 %v487, %v487
        %vm489 = vcmask 261120
        %v490 = vsel %vm489, %v488, 0.0
        %491 = vadd.xlane.f32.xlu0 %v490
        %v492 = vpop.xlane.xlu0 %491
        %v493 = vrcp.pop 32.0
        %v494 = vmul.f32 %v492, %v493
        %v495 = vadd.f32 %v494, 1e-05
        %v496 = vrsqrt.pop %v495
        %v497 = vmul.f32 %v487, %v496
        %v498 = vld [vmem:[%s1] sm:$0x1]
        %v500 = vlaneseq
        %v501 = vshrl.u32 %v500, 7
        %v502 = vsub.s32 0, %v501
        %v503 = vrot.slane %v498, %v502
        %v505 = vmul.f32 %v497, %v503
        %v506 = vpack.c.bf16 %v505, %v505
        %v507 = vld [vmem:[#allocation9] sm:$0xf]
        %v508 = vld [vmem:[#allocation9 + $0x4] sm:$0xf]
        %v509 = vld [vmem:[#allocation9 + $0x8] sm:$0xf]
        %v510 = vld [vmem:[#allocation9 + $0xc] sm:$0xf]
        %v515 = vunpack.c.l.b16 %v507
        %v516 = vunpack.c.l.b16 %v508
        %v517 = vunpack.c.l.b16 %v509
        %v518 = vunpack.c.l.b16 %v510
        %v519 = vpack.c.b16 %v516, %v515
        %v520 = vpack.c.b16 %v518, %v517
        %v524 = vsel %vm489, %v506, 0
        %526 = vmatprep.subr.bf16.mxu0 0
        %527 = vmatpush1.bf16.msra.mxu0 %v519
        %528 = vmatprep.subr.bf16.mxu0 0
        %529 = vmatpush1.bf16.msra.mxu0 %v520
        %530 = vmatprep.subr.bf16.mxu0 0
        %531 = vmatpush1.bf16.msra.mxu0 0
        %532 = vmatprep.subr.bf16.mxu0 0
        %533 = vmatpush1.bf16.msra.mxu0 0
        %534 = vmatprep.subr.bf16.mxu0 0
        %535 = vmatpush1.bf16.msra.mxu0 0
        %536 = vmatprep.subr.bf16.mxu0 0
        %537 = vmatpush1.bf16.msra.mxu0 0
        %538 = vmatprep.subr.bf16.mxu0 0
        %539 = vmatpush1.bf16.msra.mxu0 0
        %540 = vmatprep.subr.bf16.mxu0 0
        %541 = vmatpush1.bf16.msra.mxu0 0
        %542 = vmatprep.subr.bf16.mxu0 0
        %543 = vmatpush1.bf16.msra.mxu0 0
        %544 = vmatprep.subr.bf16.mxu0 0
        %545 = vmatpush1.bf16.msra.mxu0 0
        %546 = vmatprep.subr.bf16.mxu0 0
        %547 = vmatpush1.bf16.msra.mxu0 0
        %548 = vmatprep.subr.bf16.mxu0 0
        %549 = vmatpush1.bf16.msra.mxu0 0
        %550 = vmatprep.subr.bf16.mxu0 0
        %551 = vmatpush1.bf16.msra.mxu0 0
        %552 = vmatprep.subr.bf16.mxu0 0
        %553 = vmatpush1.bf16.msra.mxu0 0
        %554 = vmatprep.subr.bf16.mxu0 0
        %555 = vmatpush1.bf16.msra.mxu0 0
        %556 = vmatprep.subr.bf16.mxu0 0
        %557 = vmatpush1.bf16.msra.mxu0 0
        %558 = vmatprep.mubr.bf16.mxu0 0
        %559 = vmatmul.mubr.bf16.gmra.mrb[0].mxu0 %v524
        %v560 = vpop.f32.mrb[0].mxu0
        %v561 = vadd.f32 0.0, %v560
        %v562 = vpop.f32.mrb[0].mxu0
        %v563 = vpop.f32.mrb[0].mxu0
        %v564 = vpop.f32.mrb[0].mxu0
        %565 = vdwg.mxu0
        %vm566 = vcmask 523264
        %567 = vst.msk [vmem:[#allocation3 + $0x3] sm:$0xff] %vm566, %v561
        %v568 = vld [vmem:[#allocation3] sm:$0xff]
        %v569 = vld [vmem:[#allocation12] sm:$0x1]
        %v570 = vlaneseq
        %v571 = vshrl.u32 %v570, 7
        %v572 = vsub.s32 0, %v571
        %v573 = vrot.slane %v569, %v572
        %v574 = vmul.f32 %v568, %v573
        %v575 = vadd.f32 %v574, 0.0
        %v576 = vld [vmem:[#allocation3 + $0x1] sm:$0xff]
        %v577 = vld [vmem:[#allocation12 + $0x1] sm:$0x1]
        %v578 = vlaneseq
        %v579 = vshrl.u32 %v578, 7
        %v580 = vsub.s32 0, %v579
        %v581 = vrot.slane %v577, %v580
        %v582 = vmul.f32 %v576, %v581
        %v583 = vadd.f32 %v575, %v582
        %v584 = vld [vmem:[#allocation3 + $0x2] sm:$0xff]
        %v585 = vld [vmem:[#allocation12 + $0x2] sm:$0x1]
        %v586 = vlaneseq
        %v587 = vshrl.u32 %v586, 7
        %v588 = vsub.s32 0, %v587
        %v589 = vrot.slane %v585, %v588
        %v590 = vmul.f32 %v584, %v589
        %v591 = vadd.f32 %v583, %v590
        %v592 = vld [vmem:[#allocation3 + $0x3] sm:$0xff]
        %v593 = vld [vmem:[#allocation12 + $0x3] sm:$0x1]
        %v594 = vlaneseq
        %v595 = vshrl.u32 %v594, 7
        %v596 = vsub.s32 0, %v595
        %v597 = vrot.slane %v593, %v596
        %v598 = vmul.f32 %v592, %v597
        %v599 = vadd.f32 %v591, %v598
        %v600 = vld [vmem:[%s4] sm:$0x1]
        %v602 = vlaneseq
        %v603 = vshrl.u32 %v602, 7
        %v604 = vsub.s32 0, %v603
        %v605 = vrot.slane %v600, %v604
        %v607 = vadd.f32 %v599, %v605
        %v608 = vsub.f32 0.0, %v607
        %v609 = vmul.f32 %v608, 1.442695
        %v610 = vpow.pop %v609
        %v611 = vadd.f32 %v610, 1.0
        %v612 = vrcp.pop %v611
        %v613 = vmul.f32 %v607, %v612
        %v614 = vld [vmem:[#allocation3 + $0x8] sm:$0x7]
        %vm615 = vcmask 518144
        %616 = vst.msk [vmem:[#allocation3] sm:$0x7] %vm615, %v614
        %v617 = vpack.c.bf16 %v613, %v613
        %v618 = vld [vmem:[%s5] sm:$0xff]
        %v619 = vld [vmem:[%s5 + $0x8] sm:$0xf]
        %v620 = vld [vmem:[%s5 + $0xc] sm:$0xff]
        %v621 = vld [vmem:[%s5 + $0x14] sm:$0xf]
        %v622 = vld [vmem:[%s5 + $0x18] sm:$0xff]
        %v623 = vld [vmem:[%s5 + $0x20] sm:$0xf]
        %v624 = vld [vmem:[%s5 + $0x24] sm:$0xff]
        %v625 = vld [vmem:[%s5 + $0x2c] sm:$0xf]
        %v626 = vld [vmem:[%s5 + $0x30] sm:$0xff]
        %v627 = vld [vmem:[%s5 + $0x38] sm:$0xf]
        %v628 = vld [vmem:[%s5 + $0x3c] sm:$0xff]
        %v629 = vld [vmem:[%s5 + $0x44] sm:$0xf]
        %v630 = vld [vmem:[%s5 + $0x48] sm:$0xff]
        %v631 = vld [vmem:[%s5 + $0x50] sm:$0xf]
        %v632 = vld [vmem:[%s5 + $0x54] sm:$0xff]
        %v633 = vld [vmem:[%s5 + $0x5c] sm:$0xf]
        %v650 = vunpack.c.l.b16 %v618
        %v651 = vunpack.c.h.b16 %v618
        %v652 = vunpack.c.l.b16 %v619
        %v653 = vunpack.c.l.b16 %v620
        %v654 = vunpack.c.h.b16 %v620
        %v655 = vunpack.c.l.b16 %v621
        %v656 = vunpack.c.l.b16 %v622
        %v657 = vunpack.c.h.b16 %v622
        %v658 = vunpack.c.l.b16 %v623
        %v659 = vunpack.c.l.b16 %v624
        %v660 = vunpack.c.h.b16 %v624
        %v661 = vunpack.c.l.b16 %v625
        %v662 = vunpack.c.l.b16 %v626
        %v663 = vunpack.c.h.b16 %v626
        %v664 = vunpack.c.l.b16 %v627
        %v665 = vunpack.c.l.b16 %v628
        %v666 = vunpack.c.h.b16 %v628
        %v667 = vunpack.c.l.b16 %v629
        %v668 = vunpack.c.l.b16 %v630
        %v669 = vunpack.c.h.b16 %v630
        %v670 = vunpack.c.l.b16 %v631
        %v671 = vunpack.c.l.b16 %v632
        %v672 = vunpack.c.h.b16 %v632
        %v673 = vunpack.c.l.b16 %v633
        %v674 = vpack.c.b16 %v653, %v650
        %v675 = vpack.c.b16 %v654, %v651
        %v676 = vpack.c.b16 %v655, %v652
        %v677 = vpack.c.b16 %v659, %v656
        %v678 = vpack.c.b16 %v660, %v657
        %v679 = vpack.c.b16 %v661, %v658
        %v680 = vpack.c.b16 %v665, %v662
        %v681 = vpack.c.b16 %v666, %v663
        %v682 = vpack.c.b16 %v667, %v664
        %v683 = vpack.c.b16 %v671, %v668
        %v684 = vpack.c.b16 %v672, %v669
        %v685 = vpack.c.b16 %v673, %v670
        %v699 = vsel %vm566, %v617, 0
        %701 = vmatprep.subr.bf16.mxu0 %v675
        %702 = vmatpush1.bf16.msra.mxu0 %v674
        %703 = vmatprep.subr.bf16.mxu0 %v678
        %704 = vmatpush1.bf16.msra.mxu0 %v677
        %705 = vmatprep.subr.bf16.mxu0 %v681
        %706 = vmatpush1.bf16.msra.mxu0 %v680
        %707 = vmatprep.subr.bf16.mxu0 %v684
        %708 = vmatpush1.bf16.msra.mxu0 %v683
        %709 = vmatprep.subr.bf16.mxu0 0
        %710 = vmatpush1.bf16.msra.mxu0 0
        %711 = vmatprep.subr.bf16.mxu0 0
        %712 = vmatpush1.bf16.msra.mxu0 0
        %713 = vmatprep.subr.bf16.mxu0 0
        %714 = vmatpush1.bf16.msra.mxu0 0
        %715 = vmatprep.subr.bf16.mxu0 0
        %716 = vmatpush1.bf16.msra.mxu0 0
        %717 = vmatprep.subr.bf16.mxu0 0
        %718 = vmatpush1.bf16.msra.mxu0 0
        %719 = vmatprep.subr.bf16.mxu0 0
        %720 = vmatpush1.bf16.msra.mxu0 0
        %721 = vmatprep.subr.bf16.mxu0 0
        %722 = vmatpush1.bf16.msra.mxu0 0
        %723 = vmatprep.subr.bf16.mxu0 0
        %724 = vmatpush1.bf16.msra.mxu0 0
        %725 = vmatprep.subr.bf16.mxu0 0
        %726 = vmatpush1.bf16.msra.mxu0 0
        %727 = vmatprep.subr.bf16.mxu0 0
        %728 = vmatpush1.bf16.msra.mxu0 0
        %729 = vmatprep.subr.bf16.mxu0 0
        %730 = vmatpush1.bf16.msra.mxu0 0
        %731 = vmatprep.subr.bf16.mxu0 0
        %732 = vmatpush1.bf16.msra.mxu0 0
        %733 = vmatprep.mubr.bf16.mxu0 0
        %734 = vmatmul.mubr.bf16.gmra.mrb[0].mxu0 %v699
        %v735 = vpop.f32.mrb[0].mxu0
        %v736 = vadd.f32 0.0, %v735
        %v737 = vpop.f32.mrb[0].mxu0
        %v738 = vadd.f32 0.0, %v737
        %v739 = vpop.f32.mrb[0].mxu0
        %v740 = vpop.f32.mrb[0].mxu0
        %741 = vdwg.mxu0
        %742 = vmatprep.subr.bf16.mxu0 0
        %743 = vmatpush1.bf16.msra.mxu0 %v676
        %744 = vmatprep.subr.bf16.mxu0 0
        %745 = vmatpush1.bf16.msra.mxu0 %v679
        %746 = vmatprep.subr.bf16.mxu0 0
        %747 = vmatpush1.bf16.msra.mxu0 %v682
        %748 = vmatprep.subr.bf16.mxu0 0
        %749 = vmatpush1.bf16.msra.mxu0 %v685
        %750 = vmatprep.subr.bf16.mxu0 0
        %751 = vmatpush1.bf16.msra.mxu0 0
        %752 = vmatprep.subr.bf16.mxu0 0
        %753 = vmatpush1.bf16.msra.mxu0 0
        %754 = vmatprep.subr.bf16.mxu0 0
        %755 = vmatpush1.bf16.msra.mxu0 0
        %756 = vmatprep.subr.bf16.mxu0 0
        %757 = vmatpush1.bf16.msra.mxu0 0
        %758 = vmatprep.subr.bf16.mxu0 0
        %759 = vmatpush1.bf16.msra.mxu0 0
        %760 = vmatprep.subr.bf16.mxu0 0
        %761 = vmatpush1.bf16.msra.mxu0 0
        %762 = vmatprep.subr.bf16.mxu0 0
        %763 = vmatpush1.bf16.msra.mxu0 0
        %764 = vmatprep.subr.bf16.mxu0 0
        %765 = vmatpush1.bf16.msra.mxu0 0
        %766 = vmatprep.subr.bf16.mxu0 0
        %767 = vmatpush1.bf16.msra.mxu0 0
        %768 = vmatprep.subr.bf16.mxu0 0
        %769 = vmatpush1.bf16.msra.mxu0 0
        %770 = vmatprep.subr.bf16.mxu0 0
        %771 = vmatpush1.bf16.msra.mxu0 0
        %772 = vmatprep.subr.bf16.mxu0 0
        %773 = vmatpush1.bf16.msra.mxu0 0
        %774 = vmatprep.mubr.bf16.mxu0 0
        %775 = vmatmul.mubr.bf16.gmra.mrb[0].mxu0 %v699
        %v776 = vpop.f32.mrb[0].mxu0
        %v777 = vadd.f32 0.0, %v776
        %v778 = vpop.f32.mrb[0].mxu0
        %v779 = vpop.f32.mrb[0].mxu0
        %v780 = vpop.f32.mrb[0].mxu0
        %781 = vdwg.mxu0
        %v782 = vpack.c.bf16 %v736, %v736
        %v783 = vld [vmem:[%s6] sm:$0xf]
        %v784 = vld [vmem:[%s6 + $0x4] sm:$0xf]
        %v785 = vld [vmem:[%s6 + $0x8] sm:$0xf]
        %v786 = vld [vmem:[%s6 + $0xc] sm:$0xf]
        %v787 = vld [vmem:[%s6 + $0x10] sm:$0xf]
        %v788 = vld [vmem:[%s6 + $0x14] sm:$0xf]
        %v789 = vld [vmem:[%s6 + $0x18] sm:$0xf]
        %v790 = vld [vmem:[%s6 + $0x1c] sm:$0xf]
        %v791 = vld [vmem:[%s6 + $0x20] sm:$0xf]
        %v792 = vld [vmem:[%s6 + $0x24] sm:$0xf]
        %v793 = vld [vmem:[%s6 + $0x28] sm:$0xf]
        %v794 = vld [vmem:[%s6 + $0x2c] sm:$0xf]
        %v795 = vld [vmem:[%s6 + $0x30] sm:$0xf]
        %v796 = vld [vmem:[%s6 + $0x34] sm:$0xf]
        %v797 = vld [vmem:[%s6 + $0x38] sm:$0xf]
        %v798 = vld [vmem:[%s6 + $0x3c] sm:$0xf]
        %v799 = vld [vmem:[#allocation14] sm:$0x1]
        %v801 = vlaneseq
        %v802 = vshrl.u32 %v801, 7
        %v803 = vsub.s32 0, %v802
        %v804 = vrot.slane %v799, %v803
        %v822 = vunpack.c.l.b16 %v783
        %v823 = vunpack.c.l.b16 %v784
        %v824 = vunpack.c.l.b16 %v785
        %v825 = vunpack.c.l.b16 %v786
        %v826 = vunpack.c.l.b16 %v787
        %v827 = vunpack.c.l.b16 %v788
        %v828 = vunpack.c.l.b16 %v789
        %v829 = vunpack.c.l.b16 %v790
        %v830 = vunpack.c.l.b16 %v791
        %v831 = vunpack.c.l.b16 %v792
        %v832 = vunpack.c.l.b16 %v793
        %v833 = vunpack.c.l.b16 %v794
        %v834 = vunpack.c.l.b16 %v795
        %v835 = vunpack.c.l.b16 %v796
        %v836 = vunpack.c.l.b16 %v797
        %v837 = vunpack.c.l.b16 %v798
        %v838 = vpack.c.b16 %v823, %v822
        %v839 = vpack.c.b16 %v825, %v824
        %v840 = vpack.c.b16 %v827, %v826
        %v841 = vpack.c.b16 %v829, %v828
        %v842 = vpack.c.b16 %v831, %v830
        %v843 = vpack.c.b16 %v833, %v832
        %v844 = vpack.c.b16 %v835, %v834
        %v845 = vpack.c.b16 %v837, %v836
        %854 = vmatprep.subr.bf16.mxu0 0
        %855 = vmatpush1.bf16.msra.mxu0 %v838
        %856 = vmatprep.subr.bf16.mxu0 0
        %857 = vmatpush1.bf16.msra.mxu0 %v839
        %858 = vmatprep.subr.bf16.mxu0 0
        %859 = vmatpush1.bf16.msra.mxu0 %v840
        %860 = vmatprep.subr.bf16.mxu0 0
        %861 = vmatpush1.bf16.msra.mxu0 %v841
        %862 = vmatprep.subr.bf16.mxu0 0
        %863 = vmatpush1.bf16.msra.mxu0 %v842
        %864 = vmatprep.subr.bf16.mxu0 0
        %865 = vmatpush1.bf16.msra.mxu0 %v843
        %866 = vmatprep.subr.bf16.mxu0 0
        %867 = vmatpush1.bf16.msra.mxu0 %v844
        %868 = vmatprep.subr.bf16.mxu0 0
        %869 = vmatpush1.bf16.msra.mxu0 %v845
        %870 = vmatprep.subr.bf16.mxu0 0
        %871 = vmatpush1.bf16.msra.mxu0 0
        %872 = vmatprep.subr.bf16.mxu0 0
        %873 = vmatpush1.bf16.msra.mxu0 0
        %874 = vmatprep.subr.bf16.mxu0 0
        %875 = vmatpush1.bf16.msra.mxu0 0
        %876 = vmatprep.subr.bf16.mxu0 0
        %877 = vmatpush1.bf16.msra.mxu0 0
        %878 = vmatprep.subr.bf16.mxu0 0
        %879 = vmatpush1.bf16.msra.mxu0 0
        %880 = vmatprep.subr.bf16.mxu0 0
        %881 = vmatpush1.bf16.msra.mxu0 0
        %882 = vmatprep.subr.bf16.mxu0 0
        %883 = vmatpush1.bf16.msra.mxu0 0
        %884 = vmatprep.subr.bf16.mxu0 0
        %885 = vmatpush1.bf16.msra.mxu0 0
        %886 = vmatprep.mubr.bf16.mxu0 0
        %887 = vmatmul.mubr.bf16.gmra.mrb[0].mxu0 %v782
        %v888 = vpop.f32.mrb[0].mxu0
        %v889 = vadd.f32 %v804, %v888
        %v890 = vpop.f32.mrb[0].mxu0
        %v891 = vpop.f32.mrb[0].mxu0
        %v892 = vpop.f32.mrb[0].mxu0
        %893 = vdwg.mxu0
        %v894 = vmax.f32 %v889, 0.0
        %v895 = vand.u32 2147483647, %v889
        %v896 = vsub.f32 0.0, %v895
        %v897 = vmul.f32 %v896, 1.442695
        %v898 = vpow.pop %v897
        %v899 = vadd.f32 %v898, 1.0
        %v900 = vlog2.pop %v899
        %v901 = vmul.f32 %v900, 0.6931472
        %v902 = vadd.f32 %v894, %v901
        %903 = vst.msk [vmem:[#allocation4] sm:$0xff] %vm566, %v902
        %v904 = vmul.f32 %v902, %v613
        %905 = vst.msk [vmem:[#allocation5] sm:$0xff] %vm566, %v904
        %906 = vxpose.xlu0.b32.start [1/16] %v738, 128
        %907 = vxpose.xlu0.b32.cont [2/16] 0.0, 128
        %908 = vxpose.xlu0.b32.cont [3/16] 0.0, 128
        %909 = vxpose.xlu0.b32.cont [4/16] 0.0, 128
        %910 = vxpose.xlu0.b32.cont [5/16] 0.0, 128
        %911 = vxpose.xlu0.b32.cont [6/16] 0.0, 128
        %912 = vxpose.xlu0.b32.cont [7/16] 0.0, 128
        %913 = vxpose.xlu0.b32.cont [8/16] 0.0, 128
        %914 = vxpose.xlu0.b32.cont [9/16] 0.0, 128
        %915 = vxpose.xlu0.b32.cont [10/16] 0.0, 128
        %916 = vxpose.xlu0.b32.cont [11/16] 0.0, 128
        %917 = vxpose.xlu0.b32.cont [12/16] 0.0, 128
        %918 = vxpose.xlu0.b32.cont [13/16] 0.0, 128
        %919 = vxpose.xlu0.b32.cont [14/16] 0.0, 128
        %920 = vxpose.xlu0.b32.cont [15/16] 0.0, 128
        %921 = vxpose.xlu0.b32.end [16/16] 0.0, 128
        %v922 = vpop.trf.xlu0
        %v923 = vpop.trf.xlu0
        %v924 = vpop.trf.xlu0
        %v925 = vpop.trf.xlu0
        %v926 = vpop.trf.xlu0
        %v927 = vpop.trf.xlu0
        %v928 = vpop.trf.xlu0
        %v929 = vpop.trf.xlu0
        %v930 = vpop.trf.xlu0
        %v931 = vpop.trf.xlu0
        %v932 = vpop.trf.xlu0
        %v933 = vpop.trf.xlu0
        %v934 = vpop.trf.xlu0
        %v935 = vpop.trf.xlu0
        %v936 = vpop.trf.xlu0
        %v937 = vpop.trf.xlu0
        %938 = vxpose.xlu0.b32.start [1/16] %v777, 128
        %939 = vxpose.xlu0.b32.cont [2/16] 0.0, 128
        %940 = vxpose.xlu0.b32.cont [3/16] 0.0, 128
        %941 = vxpose.xlu0.b32.cont [4/16] 0.0, 128
        %942 = vxpose.xlu0.b32.cont [5/16] 0.0, 128
        %943 = vxpose.xlu0.b32.cont [6/16] 0.0, 128
        %944 = vxpose.xlu0.b32.cont [7/16] 0.0, 128
        %945 = vxpose.xlu0.b32.cont [8/16] 0.0, 128
        %946 = vxpose.xlu0.b32.cont [9/16] 0.0, 128
        %947 = vxpose.xlu0.b32.cont [10/16] 0.0, 128
        %948 = vxpose.xlu0.b32.cont [11/16] 0.0, 128
        %949 = vxpose.xlu0.b32.cont [12/16] 0.0, 128
        %950 = vxpose.xlu0.b32.cont [13/16] 0.0, 128
        %951 = vxpose.xlu0.b32.cont [14/16] 0.0, 128
        %952 = vxpose.xlu0.b32.cont [15/16] 0.0, 128
        %953 = vxpose.xlu0.b32.end [16/16] 0.0, 128
        %v954 = vpop.trf.xlu0
        %v955 = vpop.trf.xlu0
        %v956 = vpop.trf.xlu0
        %v957 = vpop.trf.xlu0
        %v958 = vpop.trf.xlu0
        %v959 = vpop.trf.xlu0
        %v960 = vpop.trf.xlu0
        %v961 = vpop.trf.xlu0
        %v962 = vpop.trf.xlu0
        %v963 = vpop.trf.xlu0
        %v964 = vpop.trf.xlu0
        %v965 = vpop.trf.xlu0
        %v966 = vpop.trf.xlu0
        %v967 = vpop.trf.xlu0
        %v968 = vpop.trf.xlu0
        %v969 = vpop.trf.xlu0
        %vm970 = vcmask 64512
        %971 = vst.msk [vmem:[#allocation6] sm:$0xff] %vm970, %v922
        %972 = vst.msk [vmem:[#allocation6 + $0x8] sm:$0xff] %vm970, %v923
        %973 = vst.msk [vmem:[#allocation7] sm:$0xff] %vm970, %v954
        %974 = vst.msk [vmem:[#allocation7 + $0x8] sm:$0xff] %vm970, %v955
        %v975 = vld [vmem:[#allocation15] sm:$0xff]
        %v976 = vld [vmem:[#allocation15 + $0x8] sm:$0xff]
        %v977 = vld [vmem:[#allocation2] sm:$0xff]
        %v978 = vld [vmem:[#allocation2 + $0x8] sm:$0xff]
        %v979 = vld [vmem:[#allocation4] sm:$0xff]
        %v980 = vld [vmem:[#allocation5] sm:$0xff]
        %v981 = vld [vmem:[#allocation6] sm:$0xff]
        %v982 = vld [vmem:[#allocation6 + $0x8] sm:$0xff]
        %v983 = vld [vmem:[#allocation7] sm:$0xff]
        %v984 = vld [vmem:[#allocation7 + $0x8] sm:$0xff]
        %v985 = vlaneseq
        %v986 = vshrl.u32 %v985, 7
        %v987 = vsub.s32 0, %v986
        %v988 = vrot.slane %v979, %v987
        %v989 = vmul.f32 %v988, %v975
        %v990 = vmul.f32 %v988, %v976
        %v991 = vmul.f32 %v989, 1.442695
        %v992 = vpow.pop %v991
        %v993 = vmul.f32 %v990, 1.442695
        %v994 = vpow.pop %v993
        %v995 = vlaneseq
        %v996 = vshrl.u32 %v995, 7
        %v997 = vsub.s32 1, %v996
        %v998 = vrot.slane %v979, %v997
        %v999 = vmul.f32 %v998, %v975
        %v1000 = vmul.f32 %v998, %v976
        %v1001 = vmul.f32 %v999, 1.442695
        %v1002 = vpow.pop %v1001
        %v1003 = vmul.f32 %v1000, 1.442695
        %v1004 = vpow.pop %v1003
        %v1005 = vlaneseq
        %v1006 = vshrl.u32 %v1005, 7
        %v1007 = vsub.s32 2, %v1006
        %v1008 = vrot.slane %v979, %v1007
        %v1009 = vmul.f32 %v1008, %v975
        %v1010 = vmul.f32 %v1008, %v976
        %v1011 = vmul.f32 %v1009, 1.442695
        %v1012 = vpow.pop %v1011
        %v1013 = vmul.f32 %v1010, 1.442695
        %v1014 = vpow.pop %v1013
        %v1015 = vlaneseq
        %v1016 = vshrl.u32 %v1015, 7
        %v1017 = vsub.s32 3, %v1016
        %v1018 = vrot.slane %v979, %v1017
        %v1019 = vmul.f32 %v1018, %v975
        %v1020 = vmul.f32 %v1018, %v976
        %v1021 = vmul.f32 %v1019, 1.442695
        %v1022 = vpow.pop %v1021
        %v1023 = vmul.f32 %v1020, 1.442695
        %v1024 = vpow.pop %v1023
        %v1025 = vlaneseq
        %v1026 = vshrl.u32 %v1025, 7
        %v1027 = vsub.s32 4, %v1026
        %v1028 = vrot.slane %v979, %v1027
        %v1029 = vmul.f32 %v1028, %v975
        %v1030 = vmul.f32 %v1028, %v976
        %v1031 = vmul.f32 %v1029, 1.442695
        %v1032 = vpow.pop %v1031
        %v1033 = vmul.f32 %v1030, 1.442695
        %v1034 = vpow.pop %v1033
        %v1035 = vlaneseq
        %v1036 = vshrl.u32 %v1035, 7
        %v1037 = vsub.s32 5, %v1036
        %v1038 = vrot.slane %v979, %v1037
        %v1039 = vmul.f32 %v1038, %v975
        %v1040 = vmul.f32 %v1038, %v976
        %v1041 = vmul.f32 %v1039, 1.442695
        %v1042 = vpow.pop %v1041
        %v1043 = vmul.f32 %v1040, 1.442695
        %v1044 = vpow.pop %v1043
        %v1045 = vlaneseq
        %v1046 = vshrl.u32 %v1045, 7
        %v1047 = vsub.s32 6, %v1046
        %v1048 = vrot.slane %v979, %v1047
        %v1049 = vmul.f32 %v1048, %v975
        %v1050 = vmul.f32 %v1048, %v976
        %v1051 = vmul.f32 %v1049, 1.442695
        %v1052 = vpow.pop %v1051
        %v1053 = vmul.f32 %v1050, 1.442695
        %v1054 = vpow.pop %v1053
        %v1055 = vlaneseq
        %v1056 = vshrl.u32 %v1055, 7
        %v1057 = vsub.s32 7, %v1056
        %v1058 = vrot.slane %v979, %v1057
        %v1059 = vmul.f32 %v1058, %v975
        %v1060 = vmul.f32 %v1058, %v976
        %v1061 = vmul.f32 %v1059, 1.442695
        %v1062 = vpow.pop %v1061
        %v1063 = vmul.f32 %v1060, 1.442695
        %v1064 = vpow.pop %v1063
        %v1065 = vlaneseq
        %v1066 = vshrl.u32 %v1065, 7
        %v1067 = vsub.s32 0, %v1066
        %v1068 = vrot.slane %v980, %v1067
        %1070 = vset.pattern.permute.xlu0 0
        %1071 = vperm.xlu0 %1070, %v981
        %v1072 = vpop.permute.xlu0 %1071
        %1075 = vset.pattern.permute.xlu0 0
        %1076 = vperm.xlu0 %1075, %v982
        %v1077 = vpop.permute.xlu0 %1076
        %v1079 = vmul.f32 %v1068, %v1072
        %v1080 = vmul.f32 %v1068, %v1077
        %v1081 = vlaneseq
        %v1082 = vshrl.u32 %v1081, 7
        %v1083 = vsub.s32 1, %v1082
        %v1084 = vrot.slane %v980, %v1083
        %1085 = vset.pattern.permute.xlu0 1
        %1086 = vperm.xlu0 %1085, %v981
        %v1087 = vpop.permute.xlu0 %1086
        %1089 = vset.pattern.permute.xlu0 1
        %1090 = vperm.xlu0 %1089, %v982
        %v1091 = vpop.permute.xlu0 %1090
        %v1093 = vmul.f32 %v1084, %v1087
        %v1094 = vmul.f32 %v1084, %v1091
        %v1095 = vlaneseq
        %v1096 = vshrl.u32 %v1095, 7
        %v1097 = vsub.s32 2, %v1096
        %v1098 = vrot.slane %v980, %v1097
        %1099 = vset.pattern.permute.xlu0 2
        %1100 = vperm.xlu0 %1099, %v981
        %v1101 = vpop.permute.xlu0 %1100
        %1103 = vset.pattern.permute.xlu0 2
        %1104 = vperm.xlu0 %1103, %v982
        %v1105 = vpop.permute.xlu0 %1104
        %v1107 = vmul.f32 %v1098, %v1101
        %v1108 = vmul.f32 %v1098, %v1105
        %v1109 = vlaneseq
        %v1110 = vshrl.u32 %v1109, 7
        %v1111 = vsub.s32 3, %v1110
        %v1112 = vrot.slane %v980, %v1111
        %1113 = vset.pattern.permute.xlu0 3
        %1114 = vperm.xlu0 %1113, %v981
        %v1115 = vpop.permute.xlu0 %1114
        %1117 = vset.pattern.permute.xlu0 3
        %1118 = vperm.xlu0 %1117, %v982
        %v1119 = vpop.permute.xlu0 %1118
        %v1121 = vmul.f32 %v1112, %v1115
        %v1122 = vmul.f32 %v1112, %v1119
        %v1123 = vlaneseq
        %v1124 = vshrl.u32 %v1123, 7
        %v1125 = vsub.s32 4, %v1124
        %v1126 = vrot.slane %v980, %v1125
        %1127 = vset.pattern.permute.xlu0 4
        %1128 = vperm.xlu0 %1127, %v981
        %v1129 = vpop.permute.xlu0 %1128
        %1131 = vset.pattern.permute.xlu0 4
        %1132 = vperm.xlu0 %1131, %v982
        %v1133 = vpop.permute.xlu0 %1132
        %v1135 = vmul.f32 %v1126, %v1129
        %v1136 = vmul.f32 %v1126, %v1133
        %v1137 = vlaneseq
        %v1138 = vshrl.u32 %v1137, 7
        %v1139 = vsub.s32 5, %v1138
        %v1140 = vrot.slane %v980, %v1139
        %1141 = vset.pattern.permute.xlu0 5
        %1142 = vperm.xlu0 %1141, %v981
        %v1143 = vpop.permute.xlu0 %1142
        %1145 = vset.pattern.permute.xlu0 5
        %1146 = vperm.xlu0 %1145, %v982
        %v1147 = vpop.permute.xlu0 %1146
        %v1149 = vmul.f32 %v1140, %v1143
        %v1150 = vmul.f32 %v1140, %v1147
        %v1151 = vlaneseq
        %v1152 = vshrl.u32 %v1151, 7
        %v1153 = vsub.s32 6, %v1152
        %v1154 = vrot.slane %v980, %v1153
        %1155 = vset.pattern.permute.xlu0 6
        %1156 = vperm.xlu0 %1155, %v981
        %v1157 = vpop.permute.xlu0 %1156
        %1159 = vset.pattern.permute.xlu0 6
        %1160 = vperm.xlu0 %1159, %v982
        %v1161 = vpop.permute.xlu0 %1160
        %v1163 = vmul.f32 %v1154, %v1157
        %v1164 = vmul.f32 %v1154, %v1161
        %v1165 = vlaneseq
        %v1166 = vshrl.u32 %v1165, 7
        %v1167 = vsub.s32 7, %v1166
        %v1168 = vrot.slane %v980, %v1167
        %1169 = vset.pattern.permute.xlu0 7
        %1170 = vperm.xlu0 %1169, %v981
        %v1171 = vpop.permute.xlu0 %1170
        %1173 = vset.pattern.permute.xlu0 7
        %1174 = vperm.xlu0 %1173, %v982
        %v1175 = vpop.permute.xlu0 %1174
        %v1177 = vmul.f32 %v1168, %v1171
        %v1178 = vmul.f32 %v1168, %v1175
        %v1179 = vmul.f32 %v992, %v977
        %v1180 = vmul.f32 %v994, %v978
        %v1181 = vadd.f32 %v1179, %v1079
        %v1182 = vadd.f32 %v1180, %v1080
        %1184 = vset.pattern.permute.xlu0 0
        %1185 = vperm.xlu0 %1184, %v983
        %v1186 = vpop.permute.xlu0 %1185
        %1189 = vset.pattern.permute.xlu0 0
        %1190 = vperm.xlu0 %1189, %v984
        %v1191 = vpop.permute.xlu0 %1190
        %v1193 = vmul.f32 %v1186, %v1181
        %v1194 = vmul.f32 %v1191, %v1182
        %v1195 = vsel %vm566, %v1193, 0.0
        %v1196 = vsel %vm566, %v1194, 0.0
        %v1197 = vadd.f32 %v1195, %v1196
        %v1198 = vrot.slane %v1197, 4
        %v1199 = vadd.f32 %v1197, %v1198
        %v1200 = vrot.slane %v1199, 2
        %v1201 = vadd.f32 %v1199, %v1200
        %v1202 = vrot.slane %v1201, 1
        %v1203 = vadd.f32 %v1201, %v1202
        %v1204 = vmul.f32 %v1002, %v1181
        %v1205 = vmul.f32 %v1004, %v1182
        %v1206 = vadd.f32 %v1204, %v1093
        %v1207 = vadd.f32 %v1205, %v1094
        %1208 = vset.pattern.permute.xlu0 1
        %1209 = vperm.xlu0 %1208, %v983
        %v1210 = vpop.permute.xlu0 %1209
        %1212 = vset.pattern.permute.xlu0 1
        %1213 = vperm.xlu0 %1212, %v984
        %v1214 = vpop.permute.xlu0 %1213
        %v1216 = vmul.f32 %v1210, %v1206
        %v1217 = vmul.f32 %v1214, %v1207
        %v1218 = vsel %vm566, %v1216, 0.0
        %v1219 = vsel %vm566, %v1217, 0.0
        %v1220 = vadd.f32 %v1218, %v1219
        %v1221 = vrot.slane %v1220, 4
        %v1222 = vadd.f32 %v1220, %v1221
        %v1223 = vrot.slane %v1222, 2
        %v1224 = vadd.f32 %v1222, %v1223
        %v1225 = vrot.slane %v1224, 1
        %v1226 = vadd.f32 %v1224, %v1225
        %v1227 = vmul.f32 %v1012, %v1206
        %v1228 = vmul.f32 %v1014, %v1207
        %v1229 = vadd.f32 %v1227, %v1107
        %v1230 = vadd.f32 %v1228, %v1108
        %1231 = vset.pattern.permute.xlu0 2
        %1232 = vperm.xlu0 %1231, %v983
        %v1233 = vpop.permute.xlu0 %1232
        %1235 = vset.pattern.permute.xlu0 2
        %1236 = vperm.xlu0 %1235, %v984
        %v1237 = vpop.permute.xlu0 %1236
        %v1239 = vmul.f32 %v1233, %v1229
        %v1240 = vmul.f32 %v1237, %v1230
        %v1241 = vsel %vm566, %v1239, 0.0
        %v1242 = vsel %vm566, %v1240, 0.0
        %v1243 = vadd.f32 %v1241, %v1242
        %v1244 = vrot.slane %v1243, 4
        %v1245 = vadd.f32 %v1243, %v1244
        %v1246 = vrot.slane %v1245, 2
        %v1247 = vadd.f32 %v1245, %v1246
        %v1248 = vrot.slane %v1247, 1
        %v1249 = vadd.f32 %v1247, %v1248
        %v1250 = vmul.f32 %v1022, %v1229
        %v1251 = vmul.f32 %v1024, %v1230
        %v1252 = vadd.f32 %v1250, %v1121
        %v1253 = vadd.f32 %v1251, %v1122
        %1254 = vset.pattern.permute.xlu0 3
        %1255 = vperm.xlu0 %1254, %v983
        %v1256 = vpop.permute.xlu0 %1255
        %1258 = vset.pattern.permute.xlu0 3
        %1259 = vperm.xlu0 %1258, %v984
        %v1260 = vpop.permute.xlu0 %1259
        %v1262 = vmul.f32 %v1256, %v1252
        %v1263 = vmul.f32 %v1260, %v1253
        %v1264 = vsel %vm566, %v1262, 0.0
        %v1265 = vsel %vm566, %v1263, 0.0
        %v1266 = vadd.f32 %v1264, %v1265
        %v1267 = vrot.slane %v1266, 4
        %v1268 = vadd.f32 %v1266, %v1267
        %v1269 = vrot.slane %v1268, 2
        %v1270 = vadd.f32 %v1268, %v1269
        %v1271 = vrot.slane %v1270, 1
        %v1272 = vadd.f32 %v1270, %v1271
        %v1273 = vmul.f32 %v1032, %v1252
        %v1274 = vmul.f32 %v1034, %v1253
        %v1275 = vadd.f32 %v1273, %v1135
        %v1276 = vadd.f32 %v1274, %v1136
        %1277 = vset.pattern.permute.xlu0 4
        %1278 = vperm.xlu0 %1277, %v983
        %v1279 = vpop.permute.xlu0 %1278
        %1281 = vset.pattern.permute.xlu0 4
        %1282 = vperm.xlu0 %1281, %v984
        %v1283 = vpop.permute.xlu0 %1282
        %v1285 = vmul.f32 %v1279, %v1275
        %v1286 = vmul.f32 %v1283, %v1276
        %v1287 = vsel %vm566, %v1285, 0.0
        %v1288 = vsel %vm566, %v1286, 0.0
        %v1289 = vadd.f32 %v1287, %v1288
        %v1290 = vrot.slane %v1289, 4
        %v1291 = vadd.f32 %v1289, %v1290
        %v1292 = vrot.slane %v1291, 2
        %v1293 = vadd.f32 %v1291, %v1292
        %v1294 = vrot.slane %v1293, 1
        %v1295 = vadd.f32 %v1293, %v1294
        %v1296 = vmul.f32 %v1042, %v1275
        %v1297 = vmul.f32 %v1044, %v1276
        %v1298 = vadd.f32 %v1296, %v1149
        %v1299 = vadd.f32 %v1297, %v1150
        %1300 = vset.pattern.permute.xlu0 5
        %1301 = vperm.xlu0 %1300, %v983
        %v1302 = vpop.permute.xlu0 %1301
        %1304 = vset.pattern.permute.xlu0 5
        %1305 = vperm.xlu0 %1304, %v984
        %v1306 = vpop.permute.xlu0 %1305
        %v1308 = vmul.f32 %v1302, %v1298
        %v1309 = vmul.f32 %v1306, %v1299
        %v1310 = vsel %vm566, %v1308, 0.0
        %v1311 = vsel %vm566, %v1309, 0.0
        %v1312 = vadd.f32 %v1310, %v1311
        %v1313 = vrot.slane %v1312, 4
        %v1314 = vadd.f32 %v1312, %v1313
        %v1315 = vrot.slane %v1314, 2
        %v1316 = vadd.f32 %v1314, %v1315
        %v1317 = vrot.slane %v1316, 1
        %v1318 = vadd.f32 %v1316, %v1317
        %v1319 = vmul.f32 %v1052, %v1298
        %v1320 = vmul.f32 %v1054, %v1299
        %v1321 = vadd.f32 %v1319, %v1163
        %v1322 = vadd.f32 %v1320, %v1164
        %1323 = vset.pattern.permute.xlu0 6
        %1324 = vperm.xlu0 %1323, %v983
        %v1325 = vpop.permute.xlu0 %1324
        %1327 = vset.pattern.permute.xlu0 6
        %1328 = vperm.xlu0 %1327, %v984
        %v1329 = vpop.permute.xlu0 %1328
        %v1331 = vmul.f32 %v1325, %v1321
        %v1332 = vmul.f32 %v1329, %v1322
        %v1333 = vsel %vm566, %v1331, 0.0
        %v1334 = vsel %vm566, %v1332, 0.0
        %v1335 = vadd.f32 %v1333, %v1334
        %v1336 = vrot.slane %v1335, 4
        %v1337 = vadd.f32 %v1335, %v1336
        %v1338 = vrot.slane %v1337, 2
        %v1339 = vadd.f32 %v1337, %v1338
        %v1340 = vrot.slane %v1339, 1
        %v1341 = vadd.f32 %v1339, %v1340
        %v1342 = vmul.f32 %v1062, %v1321
        %v1343 = vmul.f32 %v1064, %v1322
        %v1344 = vadd.f32 %v1342, %v1177
        %v1345 = vadd.f32 %v1343, %v1178
        %1346 = vset.pattern.permute.xlu0 7
        %1347 = vperm.xlu0 %1346, %v983
        %v1348 = vpop.permute.xlu0 %1347
        %1350 = vset.pattern.permute.xlu0 7
        %1351 = vperm.xlu0 %1350, %v984
        %v1352 = vpop.permute.xlu0 %1351
        %v1354 = vmul.f32 %v1348, %v1344
        %v1355 = vmul.f32 %v1352, %v1345
        %v1356 = vsel %vm566, %v1354, 0.0
        %v1357 = vsel %vm566, %v1355, 0.0
        %v1358 = vadd.f32 %v1356, %v1357
        %v1359 = vrot.slane %v1358, 4
        %v1360 = vadd.f32 %v1358, %v1359
        %v1361 = vrot.slane %v1360, 2
        %v1362 = vadd.f32 %v1360, %v1361
        %v1363 = vrot.slane %v1362, 1
        %v1364 = vadd.f32 %v1362, %v1363
        %vm1365 = vcmask 1040384
        %v1366 = vsel %vm1365, %v1203, %v1226
        %vm1367 = vcmask 1041408
        %v1368 = vsel %vm1367, %v1366, %v1249
        %vm1369 = vcmask 1042432
        %v1370 = vsel %vm1369, %v1368, %v1272
        %vm1371 = vcmask 1043456
        %v1372 = vsel %vm1371, %v1370, %v1295
        %vm1373 = vcmask 1044480
        %v1374 = vsel %vm1373, %v1372, %v1318
        %vm1375 = vcmask 1045504
        %v1376 = vsel %vm1375, %v1374, %v1341
        %vm1377 = vcmask 1046528
        %v1378 = vsel %vm1377, %v1376, %v1364
        %1379 = vst.msk [vmem:[#allocation8] sm:$0xff] %vm566, %v1378
        %1380 = vst.msk [vmem:[#allocation2] sm:$0xff] %vm566, %v1344
        %1381 = vst.msk [vmem:[#allocation2 + $0x8] sm:$0xff] %vm566, %v1345
        %v1382 = vld [vmem:[#allocation8] sm:$0xff]
        %v1383 = vld [vmem:[#allocation17] sm:$0x1]
        %v1385 = vlaneseq
        %v1386 = vshrl.u32 %v1385, 7
        %v1387 = vsub.s32 0, %v1386
        %v1388 = vrot.slane %v1383, %v1387
        %v1390 = vmul.f32 %v613, %v1388
        %v1391 = vadd.f32 %v1382, %v1390
        %v1392 = vsub.f32 0.0, %v561
        %v1393 = vmul.f32 %v1392, 1.442695
        %v1394 = vpow.pop %v1393
        %v1395 = vadd.f32 %v1394, 1.0
        %v1396 = vrcp.pop %v1395
        %v1397 = vmul.f32 %v561, %v1396
        %1399 = vrot.lane.b32.xlu0 %v1397, 64
        %v1400 = vpop.permute.xlu0 %1399
        %v1402 = vmul.f32 %v1391, %v1400
        %v1403 = vpack.c.bf16 %v1402, %v1402
        %v1404 = vld [vmem:[%s10] sm:$0xf]
        %v1405 = vld [vmem:[%s10 + $0x4] sm:$0xf]
        %v1406 = vld [vmem:[%s10 + $0x8] sm:$0xf]
        %v1407 = vld [vmem:[%s10 + $0xc] sm:$0xf]
        %v1408 = vld [vmem:[%s10 + $0x10] sm:$0xf]
        %v1409 = vld [vmem:[%s10 + $0x14] sm:$0xf]
        %v1410 = vld [vmem:[%s10 + $0x18] sm:$0xf]
        %v1411 = vld [vmem:[%s10 + $0x1c] sm:$0xf]
        %v1420 = vunpack.c.l.b16 %v1404
        %v1421 = vunpack.c.l.b16 %v1405
        %v1422 = vunpack.c.l.b16 %v1406
        %v1423 = vunpack.c.l.b16 %v1407
        %v1424 = vunpack.c.l.b16 %v1408
        %v1425 = vunpack.c.l.b16 %v1409
        %v1426 = vunpack.c.l.b16 %v1410
        %v1427 = vunpack.c.l.b16 %v1411
        %v1428 = vpack.c.b16 %v1421, %v1420
        %v1429 = vpack.c.b16 %v1423, %v1422
        %v1430 = vpack.c.b16 %v1425, %v1424
        %v1431 = vpack.c.b16 %v1427, %v1426
        %v1437 = vsel %vm566, %v1403, 0
        %1439 = vmatprep.subr.bf16.mxu0 0
        %1440 = vmatpush1.bf16.msra.mxu0 %v1428
        %1441 = vmatprep.subr.bf16.mxu0 0
        %1442 = vmatpush1.bf16.msra.mxu0 %v1429
        %1443 = vmatprep.subr.bf16.mxu0 0
        %1444 = vmatpush1.bf16.msra.mxu0 %v1430
        %1445 = vmatprep.subr.bf16.mxu0 0
        %1446 = vmatpush1.bf16.msra.mxu0 %v1431
        %1447 = vmatprep.subr.bf16.mxu0 0
        %1448 = vmatpush1.bf16.msra.mxu0 0
        %1449 = vmatprep.subr.bf16.mxu0 0
        %1450 = vmatpush1.bf16.msra.mxu0 0
        %1451 = vmatprep.subr.bf16.mxu0 0
        %1452 = vmatpush1.bf16.msra.mxu0 0
        %1453 = vmatprep.subr.bf16.mxu0 0
        %1454 = vmatpush1.bf16.msra.mxu0 0
        %1455 = vmatprep.subr.bf16.mxu0 0
        %1456 = vmatpush1.bf16.msra.mxu0 0
        %1457 = vmatprep.subr.bf16.mxu0 0
        %1458 = vmatpush1.bf16.msra.mxu0 0
        %1459 = vmatprep.subr.bf16.mxu0 0
        %1460 = vmatpush1.bf16.msra.mxu0 0
        %1461 = vmatprep.subr.bf16.mxu0 0
        %1462 = vmatpush1.bf16.msra.mxu0 0
        %1463 = vmatprep.subr.bf16.mxu0 0
        %1464 = vmatpush1.bf16.msra.mxu0 0
        %1465 = vmatprep.subr.bf16.mxu0 0
        %1466 = vmatpush1.bf16.msra.mxu0 0
        %1467 = vmatprep.subr.bf16.mxu0 0
        %1468 = vmatpush1.bf16.msra.mxu0 0
        %1469 = vmatprep.subr.bf16.mxu0 0
        %1470 = vmatpush1.bf16.msra.mxu0 0
        %1471 = vmatprep.mubr.bf16.mxu0 0
        %1472 = vmatmul.mubr.bf16.gmra.mrb[0].mxu0 %v1437
        %v1473 = vpop.f32.mrb[0].mxu0
        %v1474 = vadd.f32 %v487, %v1473
        %v1475 = vpop.f32.mrb[0].mxu0
        %v1476 = vpop.f32.mrb[0].mxu0
        %v1477 = vpop.f32.mrb[0].mxu0
        %1478 = vdwg.mxu0
        %1479 = vst.msk [vmem:[%s468] sm:$0xff] %vm489, %v1474
        %s1480 = sand.u32 %s288, 1
        %s1481 = scalar_lea.sflag [#allocation11], %s1480
        %s1482 = sand.u32 %s288, 1
        %s1483 = smul.addr %s1482, 8
        %s1484 = scalar_lea.vmem [#allocation18], %s1483
        // Predicated region
        $region89: #{tpu_custom_call.1} parent=63 // pred_check
          %p1485 = pneg %p298
        $region90: #{tpu_custom_call.1} parent=63 // pred_check_branch
          %1487 = sbr.rel (%p1485) target = $region92
        $region91: #{tpu_custom_call.1} parent=63 // pred_region
          %s1489 = ssub.s32 128, 128
          %1490 = vsyncadd %s1481, %s1489
          %s1491 = smul.addr %s32, 2
          %s1492 = sadd.s32 %s33, %s1491
          %s1493 = smul.addr %s1492, 128
          %s1494 = scalar_lea.hbm %s11, %s1493
          %s1496 = sshll.u32 %s1484, 4
          %s1497 = int_to_ptr.vmem [resolvable:$true] %s1496
          %1499 = dma.vmem_to_hbm [thread:$0]  %s1497, 128, %s1494, %s1481
        $region92: #{tpu_custom_call.1} parent=63 // pred_fallthru
          _
      $region64: #{tpu_custom_call.1} parent=5 // pred_fallthru
        _
      %p1500 = scmp.le.s32.totalorder 2, %s23
      // Predicated region
      $region93: #{tpu_custom_call.1} parent=5 // pred_check
        %p1501 = pneg %p1500
      $region94: #{tpu_custom_call.1} parent=5 // pred_check_branch
        %1503 = sbr.rel (%p1501) target = $region96
      $region95: #{tpu_custom_call.1} parent=5 // pred_region
        %s1504 = ssub.s32 %s23, 2
        // Predicated region
        $region97: #{tpu_custom_call.1} parent=95 // pred_check
          %p1505 = pneg %p304
        $region98: #{tpu_custom_call.1} parent=95 // pred_check_branch
          %1507 = sbr.rel (%p1505) target = $region100
        $region99: #{tpu_custom_call.1} parent=95 // pred_region
          %s1508 = sand.u32 %s289, 1
          %s1509 = scalar_lea.sflag [#allocation11], %s1508
          %s1510 = sand.u32 %s289, 1
          %s1511 = smul.addr %s1510, 8
          %s1512 = scalar_lea.vmem [#allocation18], %s1511
          %1513 = dma.done %s1509, 128
        $region100: #{tpu_custom_call.1} parent=95 // pred_fallthru
          _
      $region96: #{tpu_custom_call.1} parent=5 // pred_fallthru
        _
    $region6: #{tpu_custom_call.1} parent=1 // loop_footer
      %s27 = sadd.s32 1, %s23
    $region7: #{tpu_custom_call.1} parent=1 // loop_footer_branch
      %22 = sbr.rel target = $region3
    $region8: #{tpu_custom_call.1} parent=1 // loop_exit
      _
    %1514 = vsyncpa [#allocation10], 1
    %s1515 = scalar_lea.sflag [#allocation10], 1
    %1516 = vsyncpa %s1515, 1
    %1517 = vsyncpa [#allocation13], 1
    %1518 = vsyncpa [#allocation16], 1
    %1519 = vsyncpa [#allocation11], 1
    %s1520 = scalar_lea.sflag [#allocation11], 1
    %1521 = vsyncpa %s1520, 1

</llo_original>
